<compile_context>
chip_gen: v6e
topology: v6e:2x2x1
jax: 0.10.0
libtpu: 0.0.40
codegen_flags: <defaults>
</compile_context>

<pallas_src>
import functools

import jax
import jax.numpy as jnp
from jax.experimental import pallas as pl
from jax.experimental.pallas import tpu as pltpu

_VMEM_LIMIT = 48 * 1024 * 1024


def _layer_norm(x, gamma, beta, eps=1e-5):
    mean = jnp.mean(x, axis=-1, keepdims=True)
    var = jnp.mean((x - mean) ** 2, axis=-1, keepdims=True)
    return (x - mean) * jax.lax.rsqrt(var + eps) * gamma + beta


# --------------------------------------------------------------------------
# Kernel 1: one (batch, head) attention step per grid point.
# --------------------------------------------------------------------------
def _attention_kernel(src_ref, pos_ref,
                      wq_ref, bq_ref, wk_ref, bk_ref, wv_ref, bv_ref,
                      ctx_ref):
    cd = wq_ref.dtype                       # matmul operand dtype (bf16 or f32)
    approx = (wq_ref.dtype != jnp.float32)  # approx EUP reciprocal in bf16 mode

    x_src = src_ref[0]                              # (S, D) f32
    x_qk = (x_src + pos_ref[0]).astype(cd)          # q = k = src + pos
    x_v = x_src.astype(cd)                          # value = src

    # Per-head projections: contraction over D (MXU-friendly width).
    # NOTE: 1/sqrt(hd) is already folded into wq/bq by the wrapper.
    q = jnp.dot(x_qk, wq_ref[0], preferred_element_type=jnp.float32) + bq_ref[0]
    k = jnp.dot(x_qk, wk_ref[0], preferred_element_type=jnp.float32) + bk_ref[0]
    v = jnp.dot(x_v, wv_ref[0], preferred_element_type=jnp.float32) + bv_ref[0]

    # scores = q @ k^T without an explicit transpose (contract on hd).
    scores = jax.lax.dot_general(
        q.astype(cd), k.astype(cd),
        dimension_numbers=(((1,), (1,)), ((), ())),
        preferred_element_type=jnp.float32)         # (S, S)

    scores = scores - jnp.max(scores, axis=-1, keepdims=True)
    e = jnp.exp(scores)
    denom = jnp.sum(e, axis=-1, keepdims=True)
    attn = e * pl.reciprocal(denom, approx=approx)

    ctx = jnp.dot(attn.astype(cd), v.astype(cd),
                  preferred_element_type=jnp.float32)   # (S, hd)
    ctx_ref[0, 0] = ctx.astype(ctx_ref.dtype)


# --------------------------------------------------------------------------
# Kernel 2: out-projection + residual + LN1 + FFN + residual + LN2,
# tiled over token rows; FFN streamed over the feed-forward dim.
# --------------------------------------------------------------------------
def _token_ffn_kernel(ffn_chunk,
                      src_ref, ctx_ref,
                      wo_ref, bo_ref, w1_ref, b1_ref, w2_ref, b2_ref,
                      g1_ref, be1_ref, g2_ref, be2_ref,
                      out_ref):
    cd = wo_ref.dtype
    F = w1_ref.shape[1]

    x_v = src_ref[...].astype(jnp.float32)          # (TM, D)

    attn_out = jnp.dot(ctx_ref[...].astype(cd), wo_ref[...],
                       preferred_element_type=jnp.float32) + bo_ref[...]

    # residual + LayerNorm1 (dropout1 identity in eval mode)
    x1 = _layer_norm(x_v + attn_out, g1_ref[...], be1_ref[...])
    x1_c = x1.astype(cd)

    # feed-forward: linear1 -> ReLU -> (dropout identity) -> linear2,
    # streamed over F in ffn_chunk-wide slices to bound the hidden activation.
    ff = jnp.zeros_like(x1)
    for c in range(F // ffn_chunk):
        lo = c * ffn_chunk
        h = jnp.dot(x1_c, w1_ref[:, lo:lo + ffn_chunk],
                    preferred_element_type=jnp.float32) + b1_ref[:, lo:lo + ffn_chunk]
        h = jnp.maximum(h, 0.0).astype(cd)
        ff = ff + jnp.dot(h, w2_ref[lo:lo + ffn_chunk, :],
                          preferred_element_type=jnp.float32)
    ff = ff + b2_ref[...]

    # residual + LayerNorm2 (dropout2 identity in eval mode)
    x2 = _layer_norm(x1 + ff, g2_ref[...], be2_ref[...])
    out_ref[...] = x2.astype(out_ref.dtype)


@functools.partial(jax.jit,
                   static_argnames=("num_heads", "compute_dtype",
                                    "row_tile", "ffn_chunk"))
def transformer_encoder_layer(src, pos, params, num_heads,
                              compute_dtype=jnp.bfloat16,
                              row_tile=256, ffn_chunk=512):
    S, B, D = src.shape
    H = num_heads
    hd = D // H
    F = params["w1"].shape[1]
    cd = compute_dtype

    # ---- trace-time parameter prep (all constant-folded under jit) ----
    scale = 1.0 / (hd ** 0.5)
    wq = params["wq"] * scale            # fold attention scale into Q proj
    bq = params["bq"] * scale

    def split_heads_w(w):                # (D, D) -> (H, D, hd)
        return w.reshape(D, H, hd).transpose(1, 0, 2).astype(cd)

    def split_heads_b(b):                # (1, D) -> (H, 1, hd)
        return b.reshape(1, H, hd).transpose(1, 0, 2).astype(jnp.float32)

    wq_h, wk_h, wv_h = (split_heads_w(wq), split_heads_w(params["wk"]),
                        split_heads_w(params["wv"]))
    bq_h, bk_h, bv_h = (split_heads_b(bq), split_heads_b(params["bk"]),
                        split_heads_b(params["bv"]))

    wo_c = params["wo"].astype(cd)
    w1_c = params["w1"].astype(cd)
    w2_c = params["w2"].astype(cd)
    bo = params["bo"].astype(jnp.float32)
    b1 = params["b1"].astype(jnp.float32)
    b2 = params["b2"].astype(jnp.float32)
    g1, be1 = params["g1"].astype(jnp.float32), params["be1"].astype(jnp.float32)
    g2, be2 = params["g2"].astype(jnp.float32), params["be2"].astype(jnp.float32)

    # (S, B, D) -> (B, S, D): lane-dense last dim, batch as leading grid axis.
    src_b = src.transpose(1, 0, 2).astype(jnp.float32)
    pos_b = pos.transpose(1, 0, 2).astype(jnp.float32)

    # ---- kernel 1: attention, grid over (batch, head) ----
    ctx = pl.pallas_call(
        _attention_kernel,
        out_shape=jax.ShapeDtypeStruct((B, H, S, hd), cd),
        grid=(B, H),
        in_specs=[
            pl.BlockSpec((1, S, D), lambda b, h: (b, 0, 0)),    # src
            pl.BlockSpec((1, S, D), lambda b, h: (b, 0, 0)),    # pos
            pl.BlockSpec((1, D, hd), lambda b, h: (h, 0, 0)),   # wq (per head)
            pl.BlockSpec((1, 1, hd), lambda b, h: (h, 0, 0)),   # bq
            pl.BlockSpec((1, D, hd), lambda b, h: (h, 0, 0)),   # wk
            pl.BlockSpec((1, 1, hd), lambda b, h: (h, 0, 0)),   # bk
            pl.BlockSpec((1, D, hd), lambda b, h: (h, 0, 0)),   # wv
            pl.BlockSpec((1, 1, hd), lambda b, h: (h, 0, 0)),   # bv
        ],
        out_specs=pl.BlockSpec((1, 1, S, hd), lambda b, h: (b, h, 0, 0)),
        compiler_params=pltpu.CompilerParams(
            dimension_semantics=("parallel", "parallel"),
            vmem_limit_bytes=_VMEM_LIMIT),
    )(src_b, pos_b, wq_h, bq_h, wk_h, bk_h, wv_h, bv_h)

    # Assemble heads / flatten tokens outside the kernel (plain XLA ops).
    ctx_tok = ctx.transpose(0, 2, 1, 3).reshape(B * S, D)
    src_tok = src_b.reshape(B * S, D)

    R = B * S
    if R <= row_tile:
        TM, Rp = R, R
    else:
        TM = row_tile
        Rp = ((R + TM - 1) // TM) * TM
        pad = Rp - R
        if pad:
            ctx_tok = jnp.pad(ctx_tok, ((0, pad), (0, 0)))
            src_tok = jnp.pad(src_tok, ((0, pad), (0, 0)))

    fc = ffn_chunk if (F % ffn_chunk == 0) else F

    # ---- kernel 2: out-proj + LN1 + FFN + LN2 over token row tiles ----
    out_tok = pl.pallas_call(
        functools.partial(_token_ffn_kernel, fc),
        out_shape=jax.ShapeDtypeStruct((Rp, D), src.dtype),
        grid=(Rp // TM,),
        in_specs=[
            pl.BlockSpec((TM, D), lambda i: (i, 0)),   # src tokens (residual)
            pl.BlockSpec((TM, D), lambda i: (i, 0)),   # attention context
            pl.BlockSpec((D, D), lambda i: (0, 0)),    # wo
            pl.BlockSpec((1, D), lambda i: (0, 0)),    # bo
            pl.BlockSpec((D, F), lambda i: (0, 0)),    # w1
            pl.BlockSpec((1, F), lambda i: (0, 0)),    # b1
            pl.BlockSpec((F, D), lambda i: (0, 0)),    # w2
            pl.BlockSpec((1, D), lambda i: (0, 0)),    # b2
            pl.BlockSpec((1, D), lambda i: (0, 0)),    # g1
            pl.BlockSpec((1, D), lambda i: (0, 0)),    # be1
            pl.BlockSpec((1, D), lambda i: (0, 0)),    # g2
            pl.BlockSpec((1, D), lambda i: (0, 0)),    # be2
        ],
        out_specs=pl.BlockSpec((TM, D), lambda i: (i, 0)),
        compiler_params=pltpu.CompilerParams(
            dimension_semantics=("parallel",),
            vmem_limit_bytes=_VMEM_LIMIT),
    )(src_tok, ctx_tok, wo_c, bo, w1_c, b1, w2_c, b2, g1, be1, g2, be2)

    out = out_tok[:R].reshape(B, S, D).transpose(1, 0, 2)
    return out.astype(src.dtype)


# --------------------------------------------------------------------------
# Plain-JAX reference replicating PyTorch TransformerEncoderLayer (eval mode).
# --------------------------------------------------------------------------
def reference_jax(src, pos, params, num_heads):
    S, B, D = src.shape
    hd = D // num_heads
    x_qk = (src + pos).reshape(S * B, D)
    x_v = src.reshape(S * B, D)
    q = (x_qk @ params["wq"] + params["bq"]) / jnp.sqrt(jnp.float32(hd))
    k = x_qk @ params["wk"] + params["bk"]
    v = x_v @ params["wv"] + params["bv"]
    qh = q.reshape(S, B, num_heads, hd).transpose(1, 2, 0, 3)   # (B,H,S,hd)
    kh = k.reshape(S, B, num_heads, hd).transpose(1, 2, 0, 3)
    vh = v.reshape(S, B, num_heads, hd).transpose(1, 2, 0, 3)
    scores = qh @ kh.transpose(0, 1, 3, 2)                      # (B,H,S,S)
    attn = jax.nn.softmax(scores, axis=-1)
    ctx = (attn @ vh).transpose(2, 0, 1, 3).reshape(S * B, D)
    attn_out = ctx @ params["wo"] + params["bo"]
    x1 = _layer_norm(x_v + attn_out, params["g1"], params["be1"])
    ff = jnp.maximum(x1 @ params["w1"] + params["b1"], 0.0) @ params["w2"] + params["b2"]
    x2 = _layer_norm(x1 + ff, params["g2"], params["be2"])
    return x2.reshape(S, B, D)


def init_params(key, hidden_dims, dim_ff):
    # Deterministic synthetic init (shapes follow the nn.Module __init__).
    # Weights are stored already transposed, i.e. y = x @ W + b.
    ks = jax.random.split(key, 10)
    s = 0.1
    D, F = hidden_dims, dim_ff
    return {
        "wq": jax.random.normal(ks[0], (D, D), jnp.float32) * s,
        "bq": jax.random.normal(ks[1], (1, D), jnp.float32) * s,
        "wk": jax.random.normal(ks[2], (D, D), jnp.float32) * s,
        "bk": jax.random.normal(ks[3], (1, D), jnp.float32) * s,
        "wv": jax.random.normal(ks[4], (D, D), jnp.float32) * s,
        "bv": jax.random.normal(ks[5], (1, D), jnp.float32) * s,
        "wo": jax.random.normal(ks[6], (D, D), jnp.float32) * s,
        "bo": jnp.zeros((1, D), jnp.float32),
        "w1": jax.random.normal(ks[7], (D, F), jnp.float32) * s,
        "b1": jax.random.normal(ks[8], (1, F), jnp.float32) * s,
        "w2": jax.random.normal(ks[9], (F, D), jnp.float32) * s,
        "b2": jnp.zeros((1, D), jnp.float32),
        "g1": jnp.ones((1, D), jnp.float32),    # LayerNorm weight=1
        "be1": jnp.zeros((1, D), jnp.float32),  # LayerNorm bias=0
        "g2": jnp.ones((1, D), jnp.float32),
        "be2": jnp.zeros((1, D), jnp.float32),
    }


if __name__ == "__main__":
    S, B, D, H, F = 8, 2, 32, 4, 64   # seq, batch, hidden, heads, feed-forward

    key = jax.random.PRNGKey(0)
    k_src, k_pos, k_par = jax.random.split(key, 3)
    src = jax.random.normal(k_src, (S, B, D), jnp.float32)
    pos = jax.random.normal(k_pos, (S, B, D), jnp.float32)
    params = init_params(k_par, D, F)

    ref = reference_jax(src, pos, params, H)

    # Full-f32 path: tight numerical check against the reference.
    out_f32 = transformer_encoder_layer(src, pos, params, H,
                                        compute_dtype=jnp.float32)
    out_f32 = jax.block_until_ready(out_f32)
    assert out_f32.shape == (S, B, D)
    err32 = jnp.max(jnp.abs(out_f32 - ref))
    assert jnp.allclose(out_f32, ref, rtol=1e-3, atol=1e-3), (
        f"f32 path max abs err {err32}")

    # bf16-operand / f32-accumulate path (v6e/v7x MXU peak): sanity check.
    out_bf16 = transformer_encoder_layer(src, pos, params, H,
                                         compute_dtype=jnp.bfloat16)
    out_bf16 = jax.block_until_ready(out_bf16)
    assert out_bf16.shape == (S, B, D)
    err16 = jnp.max(jnp.abs(out_bf16 - ref))
    assert jnp.allclose(out_bf16, ref, rtol=8e-2, atol=8e-2), (
        f"bf16 path max abs err {err16}")

    print("KERNEL_OK")
</pallas_src>

<mosaic_0001>
module attributes {stable_mosaic.version = 11 : i64} {
  func.func @_attention_kernel(%arg0: i32, %arg1: i32, %arg2: memref<1x8x32xf32, #tpu.memory_space<vmem>>, %arg3: memref<1x8x32xf32, #tpu.memory_space<vmem>>, %arg4: memref<1x32x8xf32, #tpu.memory_space<vmem>>, %arg5: memref<1x1x8xf32, #tpu.memory_space<vmem>>, %arg6: memref<1x32x8xf32, #tpu.memory_space<vmem>>, %arg7: memref<1x1x8xf32, #tpu.memory_space<vmem>>, %arg8: memref<1x32x8xf32, #tpu.memory_space<vmem>>, %arg9: memref<1x1x8xf32, #tpu.memory_space<vmem>>, %arg10: memref<1x1x8x8xf32, #tpu.memory_space<vmem>>) attributes {dimension_semantics = [#tpu.dimension_semantics<parallel>, #tpu.dimension_semantics<parallel>], iteration_bounds = array<i64: 2, 4>, scalar_prefetch = 0 : i64, scratch_operands = 0 : i64, tpu.core_type = #tpu.core_type<tc>, window_params = [{transform_indices = @transform_0, window_bounds = array<i64: 1, 8, 32>}, {transform_indices = @transform_1, window_bounds = array<i64: 1, 8, 32>}, {transform_indices = @transform_2, window_bounds = array<i64: 1, 32, 8>}, {transform_indices = @transform_3, window_bounds = array<i64: 1, 1, 8>}, {transform_indices = @transform_4, window_bounds = array<i64: 1, 32, 8>}, {transform_indices = @transform_5, window_bounds = array<i64: 1, 1, 8>}, {transform_indices = @transform_6, window_bounds = array<i64: 1, 32, 8>}, {transform_indices = @transform_7, window_bounds = array<i64: 1, 1, 8>}, {transform_indices = @transform_8, window_bounds = array<i64: 1, 1, 8, 8>}]} {
    %c0 = arith.constant 0 : index
    %c0_0 = arith.constant 0 : index
    %c0_1 = arith.constant 0 : index
    %0 = vector.load %arg2[%c0, %c0_0, %c0_1] : memref<1x8x32xf32, #tpu.memory_space<vmem>>, vector<1x8x32xf32>
    %1 = vector.shape_cast %0 : vector<1x8x32xf32> to vector<8x32xf32>
    %c0_2 = arith.constant 0 : index
    %c0_3 = arith.constant 0 : index
    %c0_4 = arith.constant 0 : index
    %2 = vector.load %arg3[%c0_2, %c0_3, %c0_4] : memref<1x8x32xf32, #tpu.memory_space<vmem>>, vector<1x8x32xf32>
    %3 = vector.shape_cast %2 : vector<1x8x32xf32> to vector<8x32xf32>
    %4 = arith.addf %1, %3 : vector<8x32xf32>
    %c0_5 = arith.constant 0 : index
    %c0_6 = arith.constant 0 : index
    %c0_7 = arith.constant 0 : index
    %5 = vector.load %arg4[%c0_5, %c0_6, %c0_7] : memref<1x32x8xf32, #tpu.memory_space<vmem>>, vector<1x32x8xf32>
    %6 = vector.shape_cast %5 : vector<1x32x8xf32> to vector<32x8xf32>
    %cst = arith.constant dense<0.000000e+00> : vector<8x8xf32>
    %7 = tpu.matmul %4, %6, %cst {dimension_numbers = #tpu.dot_dimension_numbers<[1], [0], [0], [1], [0, 0, 1, 1], [], []>} : vector<8x32xf32>, vector<32x8xf32>, vector<8x8xf32> -> vector<8x8xf32>
    %c0_8 = arith.constant 0 : index
    %c0_9 = arith.constant 0 : index
    %c0_10 = arith.constant 0 : index
    %8 = vector.load %arg5[%c0_8, %c0_9, %c0_10] : memref<1x1x8xf32, #tpu.memory_space<vmem>>, vector<1x1x8xf32>
    %9 = vector.shape_cast %8 : vector<1x1x8xf32> to vector<1x8xf32>
    %10 = vector.broadcast %9 : vector<1x8xf32> to vector<8x8xf32>
    %11 = arith.addf %7, %10 : vector<8x8xf32>
    %c0_11 = arith.constant 0 : index
    %c0_12 = arith.constant 0 : index
    %c0_13 = arith.constant 0 : index
    %12 = vector.load %arg6[%c0_11, %c0_12, %c0_13] : memref<1x32x8xf32, #tpu.memory_space<vmem>>, vector<1x32x8xf32>
    %13 = vector.shape_cast %12 : vector<1x32x8xf32> to vector<32x8xf32>
    %cst_14 = arith.constant dense<0.000000e+00> : vector<8x8xf32>
    %14 = tpu.matmul %4, %13, %cst_14 {dimension_numbers = #tpu.dot_dimension_numbers<[1], [0], [0], [1], [0, 0, 1, 1], [], []>} : vector<8x32xf32>, vector<32x8xf32>, vector<8x8xf32> -> vector<8x8xf32>
    %c0_15 = arith.constant 0 : index
    %c0_16 = arith.constant 0 : index
    %c0_17 = arith.constant 0 : index
    %15 = vector.load %arg7[%c0_15, %c0_16, %c0_17] : memref<1x1x8xf32, #tpu.memory_space<vmem>>, vector<1x1x8xf32>
    %16 = vector.shape_cast %15 : vector<1x1x8xf32> to vector<1x8xf32>
    %17 = vector.broadcast %16 : vector<1x8xf32> to vector<8x8xf32>
    %18 = arith.addf %14, %17 : vector<8x8xf32>
    %c0_18 = arith.constant 0 : index
    %c0_19 = arith.constant 0 : index
    %c0_20 = arith.constant 0 : index
    %19 = vector.load %arg8[%c0_18, %c0_19, %c0_20] : memref<1x32x8xf32, #tpu.memory_space<vmem>>, vector<1x32x8xf32>
    %20 = vector.shape_cast %19 : vector<1x32x8xf32> to vector<32x8xf32>
    %cst_21 = arith.constant dense<0.000000e+00> : vector<8x8xf32>
    %21 = tpu.matmul %1, %20, %cst_21 {dimension_numbers = #tpu.dot_dimension_numbers<[1], [0], [0], [1], [0, 0, 1, 1], [], []>} : vector<8x32xf32>, vector<32x8xf32>, vector<8x8xf32> -> vector<8x8xf32>
    %c0_22 = arith.constant 0 : index
    %c0_23 = arith.constant 0 : index
    %c0_24 = arith.constant 0 : index
    %22 = vector.load %arg9[%c0_22, %c0_23, %c0_24] : memref<1x1x8xf32, #tpu.memory_space<vmem>>, vector<1x1x8xf32>
    %23 = vector.shape_cast %22 : vector<1x1x8xf32> to vector<1x8xf32>
    %24 = vector.broadcast %23 : vector<1x8xf32> to vector<8x8xf32>
    %25 = arith.addf %21, %24 : vector<8x8xf32>
    %cst_25 = arith.constant dense<0.000000e+00> : vector<8x8xf32>
    %26 = tpu.matmul %11, %18, %cst_25 {dimension_numbers = #tpu.dot_dimension_numbers<[1], [1], [0], [0], [0, 0, 1, 0], [], []>} : vector<8x8xf32>, vector<8x8xf32>, vector<8x8xf32> -> vector<8x8xf32>
    %cst_26 = arith.constant dense<0xFF800000> : vector<8xf32>
    %27 = vector.multi_reduction <maximumf>, %26, %cst_26 [1] : vector<8x8xf32> to vector<8xf32>
    %28 = vector.shape_cast %27 : vector<8xf32> to vector<8x1xf32>
    %29 = vector.broadcast %28 : vector<8x1xf32> to vector<8x8xf32>
    %30 = arith.subf %26, %29 : vector<8x8xf32>
    %31 = math.exp %30 : vector<8x8xf32>
    %cst_27 = arith.constant dense<0.000000e+00> : vector<8xf32>
    %32 = vector.multi_reduction <add>, %31, %cst_27 [1] : vector<8x8xf32> to vector<8xf32>
    %33 = vector.shape_cast %32 : vector<8xf32> to vector<8x1xf32>
    %34 = tpu.reciprocal %33 : vector<8x1xf32> -> vector<8x1xf32>
    %35 = vector.broadcast %34 : vector<8x1xf32> to vector<8x8xf32>
    %36 = arith.mulf %31, %35 : vector<8x8xf32>
    %cst_28 = arith.constant dense<0.000000e+00> : vector<8x8xf32>
    %37 = tpu.matmul %36, %25, %cst_28 {dimension_numbers = #tpu.dot_dimension_numbers<[1], [0], [0], [1], [0, 0, 1, 1], [], []>} : vector<8x8xf32>, vector<8x8xf32>, vector<8x8xf32> -> vector<8x8xf32>
    %c0_29 = arith.constant 0 : index
    %c0_30 = arith.constant 0 : index
    %c0_31 = arith.constant 0 : index
    %c0_32 = arith.constant 0 : index
    %38 = vector.load %arg10[%c0_29, %c0_30, %c0_31, %c0_32] : memref<1x1x8x8xf32, #tpu.memory_space<vmem>>, vector<1x1x8x8xf32>
    %39 = vector.shape_cast %38 : vector<1x1x8x8xf32> to vector<8x8xf32>
    %40 = vector.shape_cast %37 : vector<8x8xf32> to vector<1x1x8x8xf32>
    tpu.vector_store %arg10[%c0_29, %c0_30, %c0_31, %c0_32], %40 {strides = array<i32>} : memref<1x1x8x8xf32, #tpu.memory_space<vmem>>, vector<1x1x8x8xf32>,
    return
  }
  func.func @transform_0(%arg0: i32, %arg1: i32) -> (i32, i32, i32) {
    %c0_i32 = arith.constant 0 : i32
    %c0_i32_0 = arith.constant 0 : i32
    %c0_i32_1 = arith.constant 0 : i32
    return %arg0, %c0_i32, %c0_i32_0 : i32, i32, i32
  }
  func.func @transform_1(%arg0: i32, %arg1: i32) -> (i32, i32, i32) {
    %c0_i32 = arith.constant 0 : i32
    %c0_i32_0 = arith.constant 0 : i32
    %c0_i32_1 = arith.constant 0 : i32
    return %arg0, %c0_i32, %c0_i32_0 : i32, i32, i32
  }
  func.func @transform_2(%arg0: i32, %arg1: i32) -> (i32, i32, i32) {
    %c0_i32 = arith.constant 0 : i32
    %c0_i32_0 = arith.constant 0 : i32
    %c0_i32_1 = arith.constant 0 : i32
    return %arg1, %c0_i32, %c0_i32_0 : i32, i32, i32
  }
  func.func @transform_3(%arg0: i32, %arg1: i32) -> (i32, i32, i32) {
    %c0_i32 = arith.constant 0 : i32
    %c0_i32_0 = arith.constant 0 : i32
    %c0_i32_1 = arith.constant 0 : i32
    return %arg1, %c0_i32, %c0_i32_0 : i32, i32, i32
  }
  func.func @transform_4(%arg0: i32, %arg1: i32) -> (i32, i32, i32) {
    %c0_i32 = arith.constant 0 : i32
    %c0_i32_0 = arith.constant 0 : i32
    %c0_i32_1 = arith.constant 0 : i32
    return %arg1, %c0_i32, %c0_i32_0 : i32, i32, i32
  }
  func.func @transform_5(%arg0: i32, %arg1: i32) -> (i32, i32, i32) {
    %c0_i32 = arith.constant 0 : i32
    %c0_i32_0 = arith.constant 0 : i32
    %c0_i32_1 = arith.constant 0 : i32
    return %arg1, %c0_i32, %c0_i32_0 : i32, i32, i32
  }
  func.func @transform_6(%arg0: i32, %arg1: i32) -> (i32, i32, i32) {
    %c0_i32 = arith.constant 0 : i32
    %c0_i32_0 = arith.constant 0 : i32
    %c0_i32_1 = arith.constant 0 : i32
    return %arg1, %c0_i32, %c0_i32_0 : i32, i32, i32
  }
  func.func @transform_7(%arg0: i32, %arg1: i32) -> (i32, i32, i32) {
    %c0_i32 = arith.constant 0 : i32
    %c0_i32_0 = arith.constant 0 : i32
    %c0_i32_1 = arith.constant 0 : i32
    return %arg1, %c0_i32, %c0_i32_0 : i32, i32, i32
  }
  func.func @transform_8(%arg0: i32, %arg1: i32) -> (i32, i32, i32, i32) {
    %c0_i32 = arith.constant 0 : i32
    %c0_i32_0 = arith.constant 0 : i32
    %c0_i32_1 = arith.constant 0 : i32
    return %arg0, %arg1, %c0_i32, %c0_i32_0 : i32, i32, i32, i32
  }
}

module attributes {stable_mosaic.version = 11 : i64} {
  func.func @_token_ffn_kernel(%arg0: i32, %arg1: memref<16x32xf32, #tpu.memory_space<vmem>>, %arg2: memref<16x32xf32, #tpu.memory_space<vmem>>, %arg3: memref<32x32xf32, #tpu.memory_space<vmem>>, %arg4: memref<1x32xf32, #tpu.memory_space<vmem>>, %arg5: memref<32x64xf32, #tpu.memory_space<vmem>>, %arg6: memref<1x64xf32, #tpu.memory_space<vmem>>, %arg7: memref<64x32xf32, #tpu.memory_space<vmem>>, %arg8: memref<1x32xf32, #tpu.memory_space<vmem>>, %arg9: memref<1x32xf32, #tpu.memory_space<vmem>>, %arg10: memref<1x32xf32, #tpu.memory_space<vmem>>, %arg11: memref<1x32xf32, #tpu.memory_space<vmem>>, %arg12: memref<1x32xf32, #tpu.memory_space<vmem>>, %arg13: memref<16x32xf32, #tpu.memory_space<vmem>>) attributes {dimension_semantics = [#tpu.dimension_semantics<parallel>], iteration_bounds = array<i64: 1>, scalar_prefetch = 0 : i64, scratch_operands = 0 : i64, tpu.core_type = #tpu.core_type<tc>, window_params = [{transform_indices = @transform_0, window_bounds = array<i64: 16, 32>}, {transform_indices = @transform_1, window_bounds = array<i64: 16, 32>}, {pipeline_mode = #tpu.pipeline_mode<synchronous>, transform_indices = @transform_2, window_bounds = array<i64: 32, 32>}, {pipeline_mode = #tpu.pipeline_mode<synchronous>, transform_indices = @transform_3, window_bounds = array<i64: 1, 32>}, {pipeline_mode = #tpu.pipeline_mode<synchronous>, transform_indices = @transform_4, window_bounds = array<i64: 32, 64>}, {pipeline_mode = #tpu.pipeline_mode<synchronous>, transform_indices = @transform_5, window_bounds = array<i64: 1, 64>}, {pipeline_mode = #tpu.pipeline_mode<synchronous>, transform_indices = @transform_6, window_bounds = array<i64: 64, 32>}, {pipeline_mode = #tpu.pipeline_mode<synchronous>, transform_indices = @transform_7, window_bounds = array<i64: 1, 32>}, {pipeline_mode = #tpu.pipeline_mode<synchronous>, transform_indices = @transform_8, window_bounds = array<i64: 1, 32>}, {pipeline_mode = #tpu.pipeline_mode<synchronous>, transform_indices = @transform_9, window_bounds = array<i64: 1, 32>}, {pipeline_mode = #tpu.pipeline_mode<synchronous>, transform_indices = @transform_10, window_bounds = array<i64: 1, 32>}, {pipeline_mode = #tpu.pipeline_mode<synchronous>, transform_indices = @transform_11, window_bounds = array<i64: 1, 32>}, {transform_indices = @transform_12, window_bounds = array<i64: 16, 32>}]} {
    %c0 = arith.constant 0 : index
    %c0_0 = arith.constant 0 : index
    %0 = vector.load %arg1[%c0, %c0_0] : memref<16x32xf32, #tpu.memory_space<vmem>>, vector<16x32xf32>
    %c0_1 = arith.constant 0 : index
    %c0_2 = arith.constant 0 : index
    %1 = vector.load %arg2[%c0_1, %c0_2] : memref<16x32xf32, #tpu.memory_space<vmem>>, vector<16x32xf32>
    %c0_3 = arith.constant 0 : index
    %c0_4 = arith.constant 0 : index
    %2 = vector.load %arg3[%c0_3, %c0_4] : memref<32x32xf32, #tpu.memory_space<vmem>>, vector<32x32xf32>
    %cst = arith.constant dense<0.000000e+00> : vector<16x32xf32>
    %3 = tpu.matmul %1, %2, %cst {dimension_numbers = #tpu.dot_dimension_numbers<[1], [0], [0], [1], [0, 0, 1, 1], [], []>} : vector<16x32xf32>, vector<32x32xf32>, vector<16x32xf32> -> vector<16x32xf32>
    %c0_5 = arith.constant 0 : index
    %c0_6 = arith.constant 0 : index
    %4 = vector.load %arg4[%c0_5, %c0_6] : memref<1x32xf32, #tpu.memory_space<vmem>>, vector<1x32xf32>
    %5 = vector.broadcast %4 : vector<1x32xf32> to vector<16x32xf32>
    %6 = arith.addf %3, %5 : vector<16x32xf32>
    %7 = arith.addf %0, %6 : vector<16x32xf32>
    %c0_7 = arith.constant 0 : index
    %c0_8 = arith.constant 0 : index
    %8 = vector.load %arg9[%c0_7, %c0_8] : memref<1x32xf32, #tpu.memory_space<vmem>>, vector<1x32xf32>
    %c0_9 = arith.constant 0 : index
    %c0_10 = arith.constant 0 : index
    %9 = vector.load %arg10[%c0_9, %c0_10] : memref<1x32xf32, #tpu.memory_space<vmem>>, vector<1x32xf32>
    %cst_11 = arith.constant dense<0.000000e+00> : vector<16xf32>
    %10 = vector.multi_reduction <add>, %7, %cst_11 [1] : vector<16x32xf32> to vector<16xf32>
    %11 = vector.shape_cast %10 : vector<16xf32> to vector<16x1xf32>
    %cst_12 = arith.constant 3.200000e+01 : f32
    %12 = vector.broadcast %cst_12 : f32 to vector<16x1xf32>
    %13 = arith.divf %11, %12 : vector<16x1xf32>
    %14 = vector.broadcast %13 : vector<16x1xf32> to vector<16x32xf32>
    %15 = arith.subf %7, %14 : vector<16x32xf32>
    %16 = arith.mulf %15, %15 : vector<16x32xf32>
    %cst_13 = arith.constant dense<0.000000e+00> : vector<16xf32>
    %17 = vector.multi_reduction <add>, %16, %cst_13 [1] : vector<16x32xf32> to vector<16xf32>
    %18 = vector.shape_cast %17 : vector<16xf32> to vector<16x1xf32>
    %cst_14 = arith.constant 3.200000e+01 : f32
    %19 = vector.broadcast %cst_14 : f32 to vector<16x1xf32>
    %20 = arith.divf %18, %19 : vector<16x1xf32>
    %21 = vector.broadcast %13 : vector<16x1xf32> to vector<16x32xf32>
    %22 = arith.subf %7, %21 : vector<16x32xf32>
    %cst_15 = arith.constant 9.99999974E-6 : f32
    %23 = vector.broadcast %cst_15 : f32 to vector<16x1xf32>
    %24 = arith.addf %20, %23 : vector<16x1xf32>
    %25 = math.rsqrt %24 : vector<16x1xf32>
    %26 = vector.broadcast %25 : vector<16x1xf32> to vector<16x32xf32>
    %27 = arith.mulf %22, %26 : vector<16x32xf32>
    %28 = vector.broadcast %8 : vector<1x32xf32> to vector<16x32xf32>
    %29 = arith.mulf %27, %28 : vector<16x32xf32>
    %30 = vector.broadcast %9 : vector<1x32xf32> to vector<16x32xf32>
    %31 = arith.addf %29, %30 : vector<16x32xf32>
    %cst_16 = arith.constant 0.000000e+00 : f32
    %32 = vector.broadcast %cst_16 : f32 to vector<16x32xf32>
    %c0_17 = arith.constant 0 : index
    %c0_18 = arith.constant 0 : index
    %33 = vector.load %arg5[%c0_17, %c0_18] : memref<32x64xf32, #tpu.memory_space<vmem>>, vector<32x64xf32>
    %cst_19 = arith.constant dense<0.000000e+00> : vector<16x64xf32>
    %34 = tpu.matmul %31, %33, %cst_19 {dimension_numbers = #tpu.dot_dimension_numbers<[1], [0], [0], [1], [0, 0, 1, 1], [], []>} : vector<16x32xf32>, vector<32x64xf32>, vector<16x64xf32> -> vector<16x64xf32>
    %c0_20 = arith.constant 0 : index
    %c0_21 = arith.constant 0 : index
    %35 = vector.load %arg6[%c0_20, %c0_21] : memref<1x64xf32, #tpu.memory_space<vmem>>, vector<1x64xf32>
    %36 = vector.broadcast %35 : vector<1x64xf32> to vector<16x64xf32>
    %37 = arith.addf %34, %36 : vector<16x64xf32>
    %cst_22 = arith.constant 0.000000e+00 : f32
    %38 = vector.broadcast %cst_22 : f32 to vector<16x64xf32>
    %39 = arith.maximumf %37, %38 : vector<16x64xf32>
    %c0_23 = arith.constant 0 : index
    %c0_24 = arith.constant 0 : index
    %40 = vector.load %arg7[%c0_23, %c0_24] : memref<64x32xf32, #tpu.memory_space<vmem>>, vector<64x32xf32>
    %cst_25 = arith.constant dense<0.000000e+00> : vector<16x32xf32>
    %41 = tpu.matmul %39, %40, %cst_25 {dimension_numbers = #tpu.dot_dimension_numbers<[1], [0], [0], [1], [0, 0, 1, 1], [], []>} : vector<16x64xf32>, vector<64x32xf32>, vector<16x32xf32> -> vector<16x32xf32>
    %42 = arith.addf %32, %41 : vector<16x32xf32>
    %c0_26 = arith.constant 0 : index
    %c0_27 = arith.constant 0 : index
    %43 = vector.load %arg8[%c0_26, %c0_27] : memref<1x32xf32, #tpu.memory_space<vmem>>, vector<1x32xf32>
    %44 = vector.broadcast %43 : vector<1x32xf32> to vector<16x32xf32>
    %45 = arith.addf %42, %44 : vector<16x32xf32>
    %46 = arith.addf %31, %45 : vector<16x32xf32>
    %c0_28 = arith.constant 0 : index
    %c0_29 = arith.constant 0 : index
    %47 = vector.load %arg11[%c0_28, %c0_29] : memref<1x32xf32, #tpu.memory_space<vmem>>, vector<1x32xf32>
    %c0_30 = arith.constant 0 : index
    %c0_31 = arith.constant 0 : index
    %48 = vector.load %arg12[%c0_30, %c0_31] : memref<1x32xf32, #tpu.memory_space<vmem>>, vector<1x32xf32>
    %cst_32 = arith.constant dense<0.000000e+00> : vector<16xf32>
    %49 = vector.multi_reduction <add>, %46, %cst_32 [1] : vector<16x32xf32> to vector<16xf32>
    %50 = vector.shape_cast %49 : vector<16xf32> to vector<16x1xf32>
    %cst_33 = arith.constant 3.200000e+01 : f32
    %51 = vector.broadcast %cst_33 : f32 to vector<16x1xf32>
    %52 = arith.divf %50, %51 : vector<16x1xf32>
    %53 = vector.broadcast %52 : vector<16x1xf32> to vector<16x32xf32>
    %54 = arith.subf %46, %53 : vector<16x32xf32>
    %55 = arith.mulf %54, %54 : vector<16x32xf32>
    %cst_34 = arith.constant dense<0.000000e+00> : vector<16xf32>
    %56 = vector.multi_reduction <add>, %55, %cst_34 [1] : vector<16x32xf32> to vector<16xf32>
    %57 = vector.shape_cast %56 : vector<16xf32> to vector<16x1xf32>
    %cst_35 = arith.constant 3.200000e+01 : f32
    %58 = vector.broadcast %cst_35 : f32 to vector<16x1xf32>
    %59 = arith.divf %57, %58 : vector<16x1xf32>
    %60 = vector.broadcast %52 : vector<16x1xf32> to vector<16x32xf32>
    %61 = arith.subf %46, %60 : vector<16x32xf32>
    %cst_36 = arith.constant 9.99999974E-6 : f32
    %62 = vector.broadcast %cst_36 : f32 to vector<16x1xf32>
    %63 = arith.addf %59, %62 : vector<16x1xf32>
    %64 = math.rsqrt %63 : vector<16x1xf32>
    %65 = vector.broadcast %64 : vector<16x1xf32> to vector<16x32xf32>
    %66 = arith.mulf %61, %65 : vector<16x32xf32>
    %67 = vector.broadcast %47 : vector<1x32xf32> to vector<16x32xf32>
    %68 = arith.mulf %66, %67 : vector<16x32xf32>
    %69 = vector.broadcast %48 : vector<1x32xf32> to vector<16x32xf32>
    %70 = arith.addf %68, %69 : vector<16x32xf32>
    %c0_37 = arith.constant 0 : index
    %c0_38 = arith.constant 0 : index
    %71 = vector.load %arg13[%c0_37, %c0_38] : memref<16x32xf32, #tpu.memory_space<vmem>>, vector<16x32xf32>
    tpu.vector_store %arg13[%c0_37, %c0_38], %70 {strides = array<i32>} : memref<16x32xf32, #tpu.memory_space<vmem>>, vector<16x32xf32>,
    return
  }
  func.func @transform_0(%arg0: i32) -> (i32, i32) {
    %c0_i32 = arith.constant 0 : i32
    %c0_i32_0 = arith.constant 0 : i32
    return %arg0, %c0_i32 : i32, i32
  }
  func.func @transform_1(%arg0: i32) -> (i32, i32) {
    %c0_i32 = arith.constant 0 : i32
    %c0_i32_0 = arith.constant 0 : i32
    return %arg0, %c0_i32 : i32, i32
  }
  func.func @transform_2(%arg0: i32) -> (i32, i32) {
    %c0_i32 = arith.constant 0 : i32
    %c0_i32_0 = arith.constant 0 : i32
    %c0_i32_1 = arith.constant 0 : i32
    return %c0_i32, %c0_i32_0 : i32, i32
  }
  func.func @transform_3(%arg0: i32) -> (i32, i32) {
    %c0_i32 = arith.constant 0 : i32
    %c0_i32_0 = arith.constant 0 : i32
    %c0_i32_1 = arith.constant 0 : i32
    return %c0_i32, %c0_i32_0 : i32, i32
  }
  func.func @transform_4(%arg0: i32) -> (i32, i32) {
    %c0_i32 = arith.constant 0 : i32
    %c0_i32_0 = arith.constant 0 : i32
    %c0_i32_1 = arith.constant 0 : i32
    return %c0_i32, %c0_i32_0 : i32, i32
  }
  func.func @transform_5(%arg0: i32) -> (i32, i32) {
    %c0_i32 = arith.constant 0 : i32
    %c0_i32_0 = arith.constant 0 : i32
    %c0_i32_1 = arith.constant 0 : i32
    return %c0_i32, %c0_i32_0 : i32, i32
  }
  func.func @transform_6(%arg0: i32) -> (i32, i32) {
    %c0_i32 = arith.constant 0 : i32
    %c0_i32_0 = arith.constant 0 : i32
    %c0_i32_1 = arith.constant 0 : i32
    return %c0_i32, %c0_i32_0 : i32, i32
  }
  func.func @transform_7(%arg0: i32) -> (i32, i32) {
    %c0_i32 = arith.constant 0 : i32
    %c0_i32_0 = arith.constant 0 : i32
    %c0_i32_1 = arith.constant 0 : i32
    return %c0_i32, %c0_i32_0 : i32, i32
  }
  func.func @transform_8(%arg0: i32) -> (i32, i32) {
    %c0_i32 = arith.constant 0 : i32
    %c0_i32_0 = arith.constant 0 : i32
    %c0_i32_1 = arith.constant 0 : i32
    return %c0_i32, %c0_i32_0 : i32, i32
  }
  func.func @transform_9(%arg0: i32) -> (i32, i32) {
    %c0_i32 = arith.constant 0 : i32
    %c0_i32_0 = arith.constant 0 : i32
    %c0_i32_1 = arith.constant 0 : i32
    return %c0_i32, %c0_i32_0 : i32, i32
  }
  func.func @transform_10(%arg0: i32) -> (i32, i32) {
    %c0_i32 = arith.constant 0 : i32
    %c0_i32_0 = arith.constant 0 : i32
    %c0_i32_1 = arith.constant 0 : i32
    return %c0_i32, %c0_i32_0 : i32, i32
  }
  func.func @transform_11(%arg0: i32) -> (i32, i32) {
    %c0_i32 = arith.constant 0 : i32
    %c0_i32_0 = arith.constant 0 : i32
    %c0_i32_1 = arith.constant 0 : i32
    return %c0_i32, %c0_i32_0 : i32, i32
  }
  func.func @transform_12(%arg0: i32) -> (i32, i32) {
    %c0_i32 = arith.constant 0 : i32
    %c0_i32_0 = arith.constant 0 : i32
    return %arg0, %c0_i32 : i32, i32
  }
}

</mosaic_0001>

<llo_original>
// kernel: transformer_encoder_layer.3
$region0: #{transformer_encoder_layer.3}
  #allocation0 [shape = 'u32[]', space=smem, size = 0x4, offset = 0x4, fixed_abs, tag = 'smem constant byte address 0x4 - core index']
  #allocation1 [shape = 'u32[144,128]{1,0:T(1,128)}', space=vmem, size = 0x12000, scoped, tag = 'internal scratch']
  %s0 = inlined_call_operand.vmem [shape: f32[16,32], index: 0, kind: input, shape index: {}]
  %s1 = inlined_call_operand.vmem [shape: f32[16,32], index: 1, kind: input, shape index: {}]
  %s2 = inlined_call_operand.vmem [shape: f32[32,32], index: 2, kind: input, shape index: {}]
  %s3 = inlined_call_operand.vmem [shape: f32[1,32], index: 3, kind: input, shape index: {}]
  %s4 = inlined_call_operand.vmem [shape: f32[32,64], index: 4, kind: input, shape index: {}]
  %s5 = inlined_call_operand.vmem [shape: f32[1,64], index: 5, kind: input, shape index: {}]
  %s6 = inlined_call_operand.vmem [shape: f32[64,32], index: 6, kind: input, shape index: {}]
  %s7 = inlined_call_operand.vmem [shape: f32[1,32], index: 7, kind: input, shape index: {}]
  %s8 = inlined_call_operand.vmem [shape: f32[1,32], index: 8, kind: input, shape index: {}]
  %s9 = inlined_call_operand.vmem [shape: f32[1,32], index: 9, kind: input, shape index: {}]
  %s10 = inlined_call_operand.vmem [shape: f32[1,32], index: 10, kind: input, shape index: {}]
  %s11 = inlined_call_operand.vmem [shape: f32[1,32], index: 11, kind: input, shape index: {}]
  %s12 = inlined_call_operand.vmem [shape: f32[16,32], index: 12, kind: output, shape index: {}]
  %s13 = sld [smem:[#allocation0]]
  $region58: #{transformer_encoder_layer.3} parent=0
    _
  %s15 = ssub.s32 1, %s13
  %s16 = scalar_select 0, %s15, %s13
  // Predicated region
  $region2: #{transformer_encoder_layer.3} parent=0 // pred_check
    _
  $region3: #{transformer_encoder_layer.3} parent=0 // pred_check_branch
    %18 = sbr.rel (0) target = $region5
  $region4: #{transformer_encoder_layer.3} parent=0 // pred_region
    _
  $region5: #{transformer_encoder_layer.3} parent=0 // pred_fallthru
    _
  // Predicated region
  $region6: #{transformer_encoder_layer.3} parent=0 // pred_check
    _
  $region7: #{transformer_encoder_layer.3} parent=0 // pred_check_branch
    %20 = sbr.rel (0) target = $region9
  $region8: #{transformer_encoder_layer.3} parent=0 // pred_region
    _
  $region9: #{transformer_encoder_layer.3} parent=0 // pred_fallthru
    _
  // Predicated region
  $region10: #{transformer_encoder_layer.3} parent=0 // pred_check
    _
  $region11: #{transformer_encoder_layer.3} parent=0 // pred_check_branch
    %22 = sbr.rel (0) target = $region13
  $region12: #{transformer_encoder_layer.3} parent=0 // pred_region
    _
  $region13: #{transformer_encoder_layer.3} parent=0 // pred_fallthru
    _
  // Predicated region
  $region14: #{transformer_encoder_layer.3} parent=0 // pred_check
    _
  $region15: #{transformer_encoder_layer.3} parent=0 // pred_check_branch
    %24 = sbr.rel (0) target = $region17
  $region16: #{transformer_encoder_layer.3} parent=0 // pred_region
    _
  $region17: #{transformer_encoder_layer.3} parent=0 // pred_fallthru
    _
  // Predicated region
  $region18: #{transformer_encoder_layer.3} parent=0 // pred_check
    _
  $region19: #{transformer_encoder_layer.3} parent=0 // pred_check_branch
    %26 = sbr.rel (0) target = $region21
  $region20: #{transformer_encoder_layer.3} parent=0 // pred_region
    _
  $region21: #{transformer_encoder_layer.3} parent=0 // pred_fallthru
    _
  // Predicated region
  $region22: #{transformer_encoder_layer.3} parent=0 // pred_check
    _
  $region23: #{transformer_encoder_layer.3} parent=0 // pred_check_branch
    %28 = sbr.rel (0) target = $region25
  $region24: #{transformer_encoder_layer.3} parent=0 // pred_region
    _
  $region25: #{transformer_encoder_layer.3} parent=0 // pred_fallthru
    _
  // Predicated region
  $region26: #{transformer_encoder_layer.3} parent=0 // pred_check
    _
  $region27: #{transformer_encoder_layer.3} parent=0 // pred_check_branch
    %30 = sbr.rel (0) target = $region29
  $region28: #{transformer_encoder_layer.3} parent=0 // pred_region
    _
  $region29: #{transformer_encoder_layer.3} parent=0 // pred_fallthru
    _
  // Predicated region
  $region30: #{transformer_encoder_layer.3} parent=0 // pred_check
    _
  $region31: #{transformer_encoder_layer.3} parent=0 // pred_check_branch
    %32 = sbr.rel (0) target = $region33
  $region32: #{transformer_encoder_layer.3} parent=0 // pred_region
    _
  $region33: #{transformer_encoder_layer.3} parent=0 // pred_fallthru
    _
  // Predicated region
  $region34: #{transformer_encoder_layer.3} parent=0 // pred_check
    _
  $region35: #{transformer_encoder_layer.3} parent=0 // pred_check_branch
    %34 = sbr.rel (0) target = $region37
  $region36: #{transformer_encoder_layer.3} parent=0 // pred_region
    _
  $region37: #{transformer_encoder_layer.3} parent=0 // pred_fallthru
    _
  // Predicated region
  $region38: #{transformer_encoder_layer.3} parent=0 // pred_check
    _
  $region39: #{transformer_encoder_layer.3} parent=0 // pred_check_branch
    %36 = sbr.rel (0) target = $region41
  $region40: #{transformer_encoder_layer.3} parent=0 // pred_region
    _
  $region41: #{transformer_encoder_layer.3} parent=0 // pred_fallthru
    _
  // Predicated region
  $region42: #{transformer_encoder_layer.3} parent=0 // pred_check
    _
  $region43: #{transformer_encoder_layer.3} parent=0 // pred_check_branch
    %38 = sbr.rel (0) target = $region45
  $region44: #{transformer_encoder_layer.3} parent=0 // pred_region
    _
  $region45: #{transformer_encoder_layer.3} parent=0 // pred_fallthru
    _
  // Predicated region
  $region46: #{transformer_encoder_layer.3} parent=0 // pred_check
    _
  $region47: #{transformer_encoder_layer.3} parent=0 // pred_check_branch
    %40 = sbr.rel (0) target = $region49
  $region48: #{transformer_encoder_layer.3} parent=0 // pred_region
    _
  $region49: #{transformer_encoder_layer.3} parent=0 // pred_fallthru
    _
  %v41 = vld [vmem:[%s0] sm:$0xff]
  %v42 = vld [vmem:[%s0 + $0x8] sm:$0xff]
  %v43 = vld [vmem:[%s1] sm:$0xff]
  %v44 = vld [vmem:[%s1 + $0x8] sm:$0xff]
  %v45 = vld [vmem:[%s2] sm:$0xff]
  %v46 = vld [vmem:[%s2 + $0x8] sm:$0xff]
  %v47 = vld [vmem:[%s2 + $0x10] sm:$0xff]
  %v48 = vld [vmem:[%s2 + $0x18] sm:$0xff]
  %v49 = vld [vmem:[%s3] sm:$0x1]
  %v51 = vlaneseq
  %v52 = vshrl.u32 %v51, 7
  %v53 = vsub.s32 0, %v52
  %v54 = vrot.slane %v49, %v53
  %vm56 = vcmask 261120
  %v58 = vsel %vm56, %v43, 0
  %v61 = vsel %vm56, %v44, 0
  %63 = vmatprep.subr.mxu0 0.0
  %64 = vmatpush1.msra.mxu0 0.0
  %65 = vmatprep.subr.mxu0 0.0
  %66 = vmatpush1.msra.mxu0 0.0
  %67 = vmatprep.subr.mxu0 0.0
  %68 = vmatpush1.msra.mxu0 0.0
  %69 = vmatprep.subr.mxu0 0.0
  %70 = vmatpush1.msra.mxu0 0.0
  %71 = vmatprep.subr.mxu0 0.0
  %72 = vmatpush1.msra.mxu0 0.0
  %73 = vmatprep.subr.mxu0 0.0
  %74 = vmatpush1.msra.mxu0 0.0
  %75 = vmatprep.subr.mxu0 0.0
  %76 = vmatpush1.msra.mxu0 0.0
  %77 = vmatprep.subr.mxu0 0.0
  %78 = vmatpush1.msra.mxu0 0.0
  %79 = vmatprep.subr.mxu0 0.0
  %80 = vmatpush1.msra.mxu0 0.0
  %81 = vmatprep.subr.mxu0 0.0
  %82 = vmatpush1.msra.mxu0 0.0
  %83 = vmatprep.subr.mxu0 0.0
  %84 = vmatpush1.msra.mxu0 0.0
  %85 = vmatprep.subr.mxu0 0.0
  %86 = vmatpush1.msra.mxu0 0.0
  %87 = vmatprep.subr.mxu0 0.0
  %88 = vmatpush1.msra.mxu0 %v48
  %89 = vmatprep.subr.mxu0 0.0
  %90 = vmatpush1.msra.mxu0 %v47
  %91 = vmatprep.subr.mxu0 0.0
  %92 = vmatpush1.msra.mxu0 %v46
  %93 = vmatprep.subr.mxu0 0.0
  %94 = vmatpush1.msra.mxu0 %v45
  %95 = vmatprep.subr.mxu0 0.0
  %96 = vmatpush2.msra.mxu0 0.0
  %97 = vmatprep.subr.mxu0 0.0
  %98 = vmatpush2.msra.mxu0 0.0
  %99 = vmatprep.subr.mxu0 0.0
  %100 = vmatpush2.msra.mxu0 0.0
  %101 = vmatprep.subr.mxu0 0.0
  %102 = vmatpush2.msra.mxu0 0.0
  %103 = vmatprep.subr.mxu0 0.0
  %104 = vmatpush2.msra.mxu0 0.0
  %105 = vmatprep.subr.mxu0 0.0
  %106 = vmatpush2.msra.mxu0 0.0
  %107 = vmatprep.subr.mxu0 0.0
  %108 = vmatpush2.msra.mxu0 0.0
  %109 = vmatprep.subr.mxu0 0.0
  %110 = vmatpush2.msra.mxu0 0.0
  %111 = vmatprep.subr.mxu0 0.0
  %112 = vmatpush2.msra.mxu0 0.0
  %113 = vmatprep.subr.mxu0 0.0
  %114 = vmatpush2.msra.mxu0 0.0
  %115 = vmatprep.subr.mxu0 0.0
  %116 = vmatpush2.msra.mxu0 0.0
  %117 = vmatprep.subr.mxu0 0.0
  %118 = vmatpush2.msra.mxu0 0.0
  %119 = vmatprep.subr.mxu0 0.0
  %120 = vmatpush2.msra.mxu0 0.0
  %121 = vmatprep.subr.mxu0 0.0
  %122 = vmatpush2.msra.mxu0 0.0
  %123 = vmatprep.subr.mxu0 0.0
  %124 = vmatpush2.msra.mxu0 0.0
  %125 = vmatprep.subr.mxu0 0.0
  %126 = vmatpush2.msra.mxu0 0.0
  %127 = vmatprep.mubr.f32.mxu0 0.0
  %128 = vmatmul.mubr.f32.gmra.mxu0 %v58
  %v129 = vpop.f32.mrf.mxu0
  %v130 = vadd.f32 %v54, %v129
  %v131 = vpop.f32.mrf.mxu0
  %132 = vmatprep.mubr.f32.mxu0 0.0
  %133 = vmatmul.mubr.f32.gmra.mxu0 %v61
  %v134 = vpop.f32.mrf.mxu0
  %v135 = vadd.f32 %v54, %v134
  %v136 = vpop.f32.mrf.mxu0
  %137 = vdwg.mxu0
  %v138 = vadd.f32 %v41, %v130
  %v139 = vadd.f32 %v42, %v135
  %v140 = vld [vmem:[%s8] sm:$0x1]
  %v141 = vld [vmem:[%s9] sm:$0x1]
  %v142 = vsel %vm56, %v138, 0.0
  %143 = vadd.xlane.f32.xlu0 %v142
  %v144 = vpop.xlane.xlu0 %143
  %v145 = vsel %vm56, %v139, 0.0
  %146 = vadd.xlane.f32.xlu0 %v145
  %v147 = vpop.xlane.xlu0 %146
  %v148 = vrcp.pop 32.0
  %v149 = vmul.f32 %v144, %v148
  %v150 = vmul.f32 %v147, %v148
  %v151 = vsub.f32 %v138, %v149
  %v152 = vsub.f32 %v139, %v150
  %v153 = vmul.f32 %v151, %v151
  %v154 = vmul.f32 %v152, %v152
  %v155 = vsel %vm56, %v153, 0.0
  %156 = vadd.xlane.f32.xlu0 %v155
  %v157 = vpop.xlane.xlu0 %156
  %v158 = vsel %vm56, %v154, 0.0
  %159 = vadd.xlane.f32.xlu0 %v158
  %v160 = vpop.xlane.xlu0 %159
  %v161 = vmul.f32 %v157, %v148
  %v162 = vmul.f32 %v160, %v148
  %v163 = vadd.f32 %v161, 1e-05
  %v164 = vadd.f32 %v162, 1e-05
  %v165 = vrsqrt.pop %v163
  %v166 = vrsqrt.pop %v164
  %v167 = vmul.f32 %v151, %v165
  %v168 = vmul.f32 %v152, %v166
  %v170 = vlaneseq
  %v171 = vshrl.u32 %v170, 7
  %v172 = vsub.s32 0, %v171
  %v173 = vrot.slane %v140, %v172
  %v175 = vmul.f32 %v167, %v173
  %v176 = vmul.f32 %v168, %v173
  %v178 = vlaneseq
  %v179 = vshrl.u32 %v178, 7
  %v180 = vsub.s32 0, %v179
  %v181 = vrot.slane %v141, %v180
  %v183 = vadd.f32 %v175, %v181
  %v184 = vadd.f32 %v176, %v181
  %v185 = vld [vmem:[%s4] sm:$0xff]
  %v186 = vld [vmem:[%s4 + $0x8] sm:$0xff]
  %v187 = vld [vmem:[%s4 + $0x10] sm:$0xff]
  %v188 = vld [vmem:[%s4 + $0x18] sm:$0xff]
  %v189 = vld [vmem:[%s5] sm:$0x1]
  %v191 = vlaneseq
  %v192 = vshrl.u32 %v191, 7
  %v193 = vsub.s32 0, %v192
  %v194 = vrot.slane %v189, %v193
  %v197 = vsel %vm56, %v183, 0
  %v200 = vsel %vm56, %v184, 0
  %202 = vmatprep.subr.mxu0 0.0
  %203 = vmatpush1.msra.mxu0 0.0
  %204 = vmatprep.subr.mxu0 0.0
  %205 = vmatpush1.msra.mxu0 0.0
  %206 = vmatprep.subr.mxu0 0.0
  %207 = vmatpush1.msra.mxu0 0.0
  %208 = vmatprep.subr.mxu0 0.0
  %209 = vmatpush1.msra.mxu0 0.0
  %210 = vmatprep.subr.mxu0 0.0
  %211 = vmatpush1.msra.mxu0 0.0
  %212 = vmatprep.subr.mxu0 0.0
  %213 = vmatpush1.msra.mxu0 0.0
  %214 = vmatprep.subr.mxu0 0.0
  %215 = vmatpush1.msra.mxu0 0.0
  %216 = vmatprep.subr.mxu0 0.0
  %217 = vmatpush1.msra.mxu0 0.0
  %218 = vmatprep.subr.mxu0 0.0
  %219 = vmatpush1.msra.mxu0 0.0
  %220 = vmatprep.subr.mxu0 0.0
  %221 = vmatpush1.msra.mxu0 0.0
  %222 = vmatprep.subr.mxu0 0.0
  %223 = vmatpush1.msra.mxu0 0.0
  %224 = vmatprep.subr.mxu0 0.0
  %225 = vmatpush1.msra.mxu0 0.0
  %226 = vmatprep.subr.mxu0 0.0
  %227 = vmatpush1.msra.mxu0 %v188
  %228 = vmatprep.subr.mxu0 0.0
  %229 = vmatpush1.msra.mxu0 %v187
  %230 = vmatprep.subr.mxu0 0.0
  %231 = vmatpush1.msra.mxu0 %v186
  %232 = vmatprep.subr.mxu0 0.0
  %233 = vmatpush1.msra.mxu0 %v185
  %234 = vmatprep.subr.mxu0 0.0
  %235 = vmatpush2.msra.mxu0 0.0
  %236 = vmatprep.subr.mxu0 0.0
  %237 = vmatpush2.msra.mxu0 0.0
  %238 = vmatprep.subr.mxu0 0.0
  %239 = vmatpush2.msra.mxu0 0.0
  %240 = vmatprep.subr.mxu0 0.0
  %241 = vmatpush2.msra.mxu0 0.0
  %242 = vmatprep.subr.mxu0 0.0
  %243 = vmatpush2.msra.mxu0 0.0
  %244 = vmatprep.subr.mxu0 0.0
  %245 = vmatpush2.msra.mxu0 0.0
  %246 = vmatprep.subr.mxu0 0.0
  %247 = vmatpush2.msra.mxu0 0.0
  %248 = vmatprep.subr.mxu0 0.0
  %249 = vmatpush2.msra.mxu0 0.0
  %250 = vmatprep.subr.mxu0 0.0
  %251 = vmatpush2.msra.mxu0 0.0
  %252 = vmatprep.subr.mxu0 0.0
  %253 = vmatpush2.msra.mxu0 0.0
  %254 = vmatprep.subr.mxu0 0.0
  %255 = vmatpush2.msra.mxu0 0.0
  %256 = vmatprep.subr.mxu0 0.0
  %257 = vmatpush2.msra.mxu0 0.0
  %258 = vmatprep.subr.mxu0 0.0
  %259 = vmatpush2.msra.mxu0 0.0
  %260 = vmatprep.subr.mxu0 0.0
  %261 = vmatpush2.msra.mxu0 0.0
  %262 = vmatprep.subr.mxu0 0.0
  %263 = vmatpush2.msra.mxu0 0.0
  %264 = vmatprep.subr.mxu0 0.0
  %265 = vmatpush2.msra.mxu0 0.0
  %266 = vmatprep.mubr.f32.mxu0 0.0
  %267 = vmatmul.mubr.f32.gmra.mxu0 %v197
  %v268 = vpop.f32.mrf.mxu0
  %v269 = vadd.f32 %v194, %v268
  %v270 = vpop.f32.mrf.mxu0
  %271 = vmatprep.mubr.f32.mxu0 0.0
  %272 = vmatmul.mubr.f32.gmra.mxu0 %v200
  %v273 = vpop.f32.mrf.mxu0
  %v274 = vadd.f32 %v194, %v273
  %v275 = vpop.f32.mrf.mxu0
  %276 = vdwg.mxu0
  %v277 = vmax.f32 %v269, 0.0
  %v278 = vmax.f32 %v274, 0.0
  %v279 = vld [vmem:[%s6] sm:$0xff]
  %v280 = vld [vmem:[%s6 + $0x8] sm:$0xff]
  %v281 = vld [vmem:[%s6 + $0x10] sm:$0xff]
  %v282 = vld [vmem:[%s6 + $0x18] sm:$0xff]
  %v283 = vld [vmem:[%s6 + $0x20] sm:$0xff]
  %v284 = vld [vmem:[%s6 + $0x28] sm:$0xff]
  %v285 = vld [vmem:[%s6 + $0x30] sm:$0xff]
  %v286 = vld [vmem:[%s6 + $0x38] sm:$0xff]
  %v287 = vld [vmem:[%s7] sm:$0x1]
  %v289 = vlaneseq
  %v290 = vshrl.u32 %v289, 7
  %v291 = vsub.s32 0, %v290
  %v292 = vrot.slane %v287, %v291
  %vm294 = vcmask 523264
  %v296 = vsel %vm294, %v277, 0
  %v299 = vsel %vm294, %v278, 0
  %301 = vmatprep.subr.mxu0 0.0
  %302 = vmatpush1.msra.mxu0 0.0
  %303 = vmatprep.subr.mxu0 0.0
  %304 = vmatpush1.msra.mxu0 0.0
  %305 = vmatprep.subr.mxu0 0.0
  %306 = vmatpush1.msra.mxu0 0.0
  %307 = vmatprep.subr.mxu0 0.0
  %308 = vmatpush1.msra.mxu0 0.0
  %309 = vmatprep.subr.mxu0 0.0
  %310 = vmatpush1.msra.mxu0 0.0
  %311 = vmatprep.subr.mxu0 0.0
  %312 = vmatpush1.msra.mxu0 0.0
  %313 = vmatprep.subr.mxu0 0.0
  %314 = vmatpush1.msra.mxu0 0.0
  %315 = vmatprep.subr.mxu0 0.0
  %316 = vmatpush1.msra.mxu0 0.0
  %317 = vmatprep.subr.mxu0 0.0
  %318 = vmatpush1.msra.mxu0 %v286
  %319 = vmatprep.subr.mxu0 0.0
  %320 = vmatpush1.msra.mxu0 %v285
  %321 = vmatprep.subr.mxu0 0.0
  %322 = vmatpush1.msra.mxu0 %v284
  %323 = vmatprep.subr.mxu0 0.0
  %324 = vmatpush1.msra.mxu0 %v283
  %325 = vmatprep.subr.mxu0 0.0
  %326 = vmatpush1.msra.mxu0 %v282
  %327 = vmatprep.subr.mxu0 0.0
  %328 = vmatpush1.msra.mxu0 %v281
  %329 = vmatprep.subr.mxu0 0.0
  %330 = vmatpush1.msra.mxu0 %v280
  %331 = vmatprep.subr.mxu0 0.0
  %332 = vmatpush1.msra.mxu0 %v279
  %333 = vmatprep.subr.mxu0 0.0
  %334 = vmatpush2.msra.mxu0 0.0
  %335 = vmatprep.subr.mxu0 0.0
  %336 = vmatpush2.msra.mxu0 0.0
  %337 = vmatprep.subr.mxu0 0.0
  %338 = vmatpush2.msra.mxu0 0.0
  %339 = vmatprep.subr.mxu0 0.0
  %340 = vmatpush2.msra.mxu0 0.0
  %341 = vmatprep.subr.mxu0 0.0
  %342 = vmatpush2.msra.mxu0 0.0
  %343 = vmatprep.subr.mxu0 0.0
  %344 = vmatpush2.msra.mxu0 0.0
  %345 = vmatprep.subr.mxu0 0.0
  %346 = vmatpush2.msra.mxu0 0.0
  %347 = vmatprep.subr.mxu0 0.0
  %348 = vmatpush2.msra.mxu0 0.0
  %349 = vmatprep.subr.mxu0 0.0
  %350 = vmatpush2.msra.mxu0 0.0
  %351 = vmatprep.subr.mxu0 0.0
  %352 = vmatpush2.msra.mxu0 0.0
  %353 = vmatprep.subr.mxu0 0.0
  %354 = vmatpush2.msra.mxu0 0.0
  %355 = vmatprep.subr.mxu0 0.0
  %356 = vmatpush2.msra.mxu0 0.0
  %357 = vmatprep.subr.mxu0 0.0
  %358 = vmatpush2.msra.mxu0 0.0
  %359 = vmatprep.subr.mxu0 0.0
  %360 = vmatpush2.msra.mxu0 0.0
  %361 = vmatprep.subr.mxu0 0.0
  %362 = vmatpush2.msra.mxu0 0.0
  %363 = vmatprep.subr.mxu0 0.0
  %364 = vmatpush2.msra.mxu0 0.0
  %365 = vmatprep.mubr.f32.mxu0 0.0
  %366 = vmatmul.mubr.f32.gmra.mxu0 %v296
  %v367 = vpop.f32.mrf.mxu0
  %v368 = vadd.f32 %v292, %v367
  %v369 = vpop.f32.mrf.mxu0
  %370 = vmatprep.mubr.f32.mxu0 0.0
  %371 = vmatmul.mubr.f32.gmra.mxu0 %v299
  %v372 = vpop.f32.mrf.mxu0
  %v373 = vadd.f32 %v292, %v372
  %v374 = vpop.f32.mrf.mxu0
  %375 = vdwg.mxu0
  %v376 = vadd.f32 %v183, %v368
  %v377 = vadd.f32 %v184, %v373
  %v378 = vld [vmem:[%s10] sm:$0x1]
  %v379 = vld [vmem:[%s11] sm:$0x1]
  %v380 = vsel %vm56, %v376, 0.0
  %381 = vadd.xlane.f32.xlu0 %v380
  %v382 = vpop.xlane.xlu0 %381
  %v383 = vsel %vm56, %v377, 0.0
  %384 = vadd.xlane.f32.xlu0 %v383
  %v385 = vpop.xlane.xlu0 %384
  %v386 = vmul.f32 %v382, %v148
  %v387 = vmul.f32 %v385, %v148
  %v388 = vsub.f32 %v376, %v386
  %v389 = vsub.f32 %v377, %v387
  %v390 = vmul.f32 %v388, %v388
  %v391 = vmul.f32 %v389, %v389
  %v392 = vsel %vm56, %v390, 0.0
  %393 = vadd.xlane.f32.xlu0 %v392
  %v394 = vpop.xlane.xlu0 %393
  %v395 = vsel %vm56, %v391, 0.0
  %396 = vadd.xlane.f32.xlu0 %v395
  %v397 = vpop.xlane.xlu0 %396
  %v398 = vmul.f32 %v394, %v148
  %v399 = vmul.f32 %v397, %v148
  %v400 = vadd.f32 %v398, 1e-05
  %v401 = vadd.f32 %v399, 1e-05
  %v402 = vrsqrt.pop %v400
  %v403 = vrsqrt.pop %v401
  %v404 = vmul.f32 %v388, %v402
  %v405 = vmul.f32 %v389, %v403
  %v407 = vlaneseq
  %v408 = vshrl.u32 %v407, 7
  %v409 = vsub.s32 0, %v408
  %v410 = vrot.slane %v378, %v409
  %v412 = vmul.f32 %v404, %v410
  %v413 = vmul.f32 %v405, %v410
  %v415 = vlaneseq
  %v416 = vshrl.u32 %v415, 7
  %v417 = vsub.s32 0, %v416
  %v418 = vrot.slane %v379, %v417
  %v420 = vadd.f32 %v412, %v418
  %v421 = vadd.f32 %v413, %v418
  %422 = vst.msk [vmem:[%s12] sm:$0xff] %vm56, %v420
  %423 = vst.msk [vmem:[%s12 + $0x8] sm:$0xff] %vm56, %v421
  // Predicated region
  $region50: #{transformer_encoder_layer.3} parent=0 // pred_check
    _
  $region51: #{transformer_encoder_layer.3} parent=0 // pred_check_branch
    %425 = sbr.rel (0) target = $region53
  $region52: #{transformer_encoder_layer.3} parent=0 // pred_region
    _
  $region53: #{transformer_encoder_layer.3} parent=0 // pred_fallthru
    _
  // Predicated region
  $region54: #{transformer_encoder_layer.3} parent=0 // pred_check
    _
  $region55: #{transformer_encoder_layer.3} parent=0 // pred_check_branch
    %427 = sbr.rel (0) target = $region57
  $region56: #{transformer_encoder_layer.3} parent=0 // pred_region
    _
  $region57: #{transformer_encoder_layer.3} parent=0 // pred_fallthru
    _

// kernel: transformer_encoder_layer.2
$region0: #{transformer_encoder_layer.2}
  #allocation0 [shape = 'u32[]', space=smem, size = 0x4, offset = 0x4, fixed_abs, tag = 'smem constant byte address 0x4 - core index']
  #allocation1 [shape = 'u32[144,128]{1,0:T(1,128)}', space=vmem, size = 0x12000, scoped, tag = 'internal scratch']
  %s0 = inlined_call_operand.vmem [shape: f32[2,8,32], index: 0, kind: input, shape index: {}]
  %s1 = inlined_call_operand.vmem [shape: f32[2,8,32], index: 1, kind: input, shape index: {}]
  %s2 = inlined_call_operand.vmem [shape: f32[4,32,8], index: 2, kind: input, shape index: {}]
  %s3 = inlined_call_operand.vmem [shape: f32[4,1,8], index: 3, kind: input, shape index: {}]
  %s4 = inlined_call_operand.vmem [shape: f32[4,32,8], index: 4, kind: input, shape index: {}]
  %s5 = inlined_call_operand.vmem [shape: f32[4,1,8], index: 5, kind: input, shape index: {}]
  %s6 = inlined_call_operand.vmem [shape: f32[4,32,8], index: 6, kind: input, shape index: {}]
  %s7 = inlined_call_operand.vmem [shape: f32[4,1,8], index: 7, kind: input, shape index: {}]
  %s8 = inlined_call_operand.vmem [shape: f32[2,4,8,8], index: 8, kind: output, shape index: {}]
  %s9 = sld [smem:[#allocation0]]
  $region65: #{transformer_encoder_layer.2} parent=0
    _
  %s11 = ssub.s32 1, %s9
  %s12 = scalar_select 0, %s11, %s9
  loop: start=0, step=1, limit=10
  $region2: #{transformer_encoder_layer.2} parent=0 // loop_pre_header
    _
  $region3: #{transformer_encoder_layer.2} parent=0 // loop_header
    %s14 = sphi 0, %s18
    %p15 = scmp.ge.s32.totalorder %s14, 10
    %s21 = sphi 0, %s33
    %s22 = sphi 0, %s29
    %s23 = sphi 0, %s21
    %s24 = sphi 0, %s22
    %s25 = sphi 0, %s23
    %s26 = sphi 0, %s24
    %s36 = sphi 0, %s38
    %s39 = sphi 0, %s36
    %s40 = sphi 0, %s39
    %s56 = sphi 0, %s40
    %s62 = sphi 0, %s64
    %s65 = sphi 0, %s62
    %s66 = sphi 0, %s65
    %s82 = sphi 0, %s66
    %s88 = sphi 0, %s90
    %s91 = sphi 0, %s88
    %s92 = sphi 0, %s91
    %s108 = sphi 0, %s92
    %s114 = sphi 0, %s116
    %s117 = sphi 0, %s114
    %s118 = sphi 0, %s117
    %s134 = sphi 0, %s118
    %s140 = sphi 0, %s142
    %s143 = sphi 0, %s140
    %s144 = sphi 0, %s143
    %s160 = sphi 0, %s144
    %s166 = sphi 0, %s168
    %s169 = sphi 0, %s166
    %s170 = sphi 0, %s169
    %s186 = sphi 0, %s170
    %s192 = sphi 0, %s194
    %s195 = sphi 0, %s192
    %s196 = sphi 0, %s195
    %s212 = sphi 0, %s196
    %s218 = sphi 0, %s220
    %s221 = sphi 0, %s218
    %s222 = sphi 0, %s221
    %s238 = sphi 0, %s222
    %s246 = sphi 0, %s248
    %s249 = sphi 0, %s246
    %s250 = sphi 0, %s249
    %s266 = sphi 0, %s250
  $region4: #{transformer_encoder_layer.2} parent=0 // loop_header_branch
    %17 = sbr.rel (%p15) target = $region8
  $region5: #{transformer_encoder_layer.2} parent=0 // loop_body
    %s19 = ssub.s32 %s14, 1
    %s20 = ssub.s32 %s14, 2
    %s27 = sadd.s32 1, %s22
    %p28 = scmp.ge.s32.totalorder %s27, 4
    %s29 = scalar_select %p28, 0, %s27
    %s30 = sadd.s32 1, %s21
    %s31 = scalar_select %p28, %s30, %s21
    %p32 = scmp.ge.s32.totalorder %s31, 2
    %s33 = scalar_select %p32, 0, %s31
    %s34 = ssub.s32 %s21, %s33
    %p35 = scmp.eq.s32.totalorder %s34, 0
    %s37 = sadd.s32 %s36, 1
    %s38 = scalar_select %p35, %s36, %s37
    %p41 = pneg %p35
    %p42 = scmp.eq.s32.totalorder %s14, 7
    %p43 = por %p41, %p42
    %p44 = scmp.ne.s32.totalorder %s36, %s39
    %p45 = scmp.eq.s32.totalorder %s14, 0
    %p46 = por %p44, %p45
    %p47 = scmp.ne.s32.totalorder %s36, %s39
    %p48 = scmp.eq.s32.totalorder %s19, 7
    %p49 = por %p47, %p48
    %p50 = scmp.ne.s32.totalorder %s39, %s40
    %p51 = scmp.eq.s32.totalorder %s19, 0
    %p52 = por %p50, %p51
    %p53 = scmp.ne.s32.totalorder %s39, %s40
    %p54 = scmp.eq.s32.totalorder %s20, 7
    %p55 = por %p53, %p54
    %p57 = scmp.ne.s32.totalorder %s40, %s56
    %p58 = scmp.eq.s32.totalorder %s20, 0
    %p59 = por %p57, %p58
    %s60 = ssub.s32 %s21, %s33
    %p61 = scmp.eq.s32.totalorder %s60, 0
    %s63 = sadd.s32 %s62, 1
    %s64 = scalar_select %p61, %s62, %s63
    %p67 = pneg %p61
    %p68 = scmp.eq.s32.totalorder %s14, 7
    %p69 = por %p67, %p68
    %p70 = scmp.ne.s32.totalorder %s62, %s65
    %p71 = scmp.eq.s32.totalorder %s14, 0
    %p72 = por %p70, %p71
    %p73 = scmp.ne.s32.totalorder %s62, %s65
    %p74 = scmp.eq.s32.totalorder %s19, 7
    %p75 = por %p73, %p74
    %p76 = scmp.ne.s32.totalorder %s65, %s66
    %p77 = scmp.eq.s32.totalorder %s19, 0
    %p78 = por %p76, %p77
    %p79 = scmp.ne.s32.totalorder %s65, %s66
    %p80 = scmp.eq.s32.totalorder %s20, 7
    %p81 = por %p79, %p80
    %p83 = scmp.ne.s32.totalorder %s66, %s82
    %p84 = scmp.eq.s32.totalorder %s20, 0
    %p85 = por %p83, %p84
    %s86 = ssub.s32 %s22, %s29
    %p87 = scmp.eq.s32.totalorder %s86, 0
    %s89 = sadd.s32 %s88, 1
    %s90 = scalar_select %p87, %s88, %s89
    %p93 = pneg %p87
    %p94 = scmp.eq.s32.totalorder %s14, 7
    %p95 = por %p93, %p94
    %p96 = scmp.ne.s32.totalorder %s88, %s91
    %p97 = scmp.eq.s32.totalorder %s14, 0
    %p98 = por %p96, %p97
    %p99 = scmp.ne.s32.totalorder %s88, %s91
    %p100 = scmp.eq.s32.totalorder %s19, 7
    %p101 = por %p99, %p100
    %p102 = scmp.ne.s32.totalorder %s91, %s92
    %p103 = scmp.eq.s32.totalorder %s19, 0
    %p104 = por %p102, %p103
    %p105 = scmp.ne.s32.totalorder %s91, %s92
    %p106 = scmp.eq.s32.totalorder %s20, 7
    %p107 = por %p105, %p106
    %p109 = scmp.ne.s32.totalorder %s92, %s108
    %p110 = scmp.eq.s32.totalorder %s20, 0
    %p111 = por %p109, %p110
    %s112 = ssub.s32 %s22, %s29
    %p113 = scmp.eq.s32.totalorder %s112, 0
    %s115 = sadd.s32 %s114, 1
    %s116 = scalar_select %p113, %s114, %s115
    %p119 = pneg %p113
    %p120 = scmp.eq.s32.totalorder %s14, 7
    %p121 = por %p119, %p120
    %p122 = scmp.ne.s32.totalorder %s114, %s117
    %p123 = scmp.eq.s32.totalorder %s14, 0
    %p124 = por %p122, %p123
    %p125 = scmp.ne.s32.totalorder %s114, %s117
    %p126 = scmp.eq.s32.totalorder %s19, 7
    %p127 = por %p125, %p126
    %p128 = scmp.ne.s32.totalorder %s117, %s118
    %p129 = scmp.eq.s32.totalorder %s19, 0
    %p130 = por %p128, %p129
    %p131 = scmp.ne.s32.totalorder %s117, %s118
    %p132 = scmp.eq.s32.totalorder %s20, 7
    %p133 = por %p131, %p132
    %p135 = scmp.ne.s32.totalorder %s118, %s134
    %p136 = scmp.eq.s32.totalorder %s20, 0
    %p137 = por %p135, %p136
    %s138 = ssub.s32 %s22, %s29
    %p139 = scmp.eq.s32.totalorder %s138, 0
    %s141 = sadd.s32 %s140, 1
    %s142 = scalar_select %p139, %s140, %s141
    %p145 = pneg %p139
    %p146 = scmp.eq.s32.totalorder %s14, 7
    %p147 = por %p145, %p146
    %p148 = scmp.ne.s32.totalorder %s140, %s143
    %p149 = scmp.eq.s32.totalorder %s14, 0
    %p150 = por %p148, %p149
    %p151 = scmp.ne.s32.totalorder %s140, %s143
    %p152 = scmp.eq.s32.totalorder %s19, 7
    %p153 = por %p151, %p152
    %p154 = scmp.ne.s32.totalorder %s143, %s144
    %p155 = scmp.eq.s32.totalorder %s19, 0
    %p156 = por %p154, %p155
    %p157 = scmp.ne.s32.totalorder %s143, %s144
    %p158 = scmp.eq.s32.totalorder %s20, 7
    %p159 = por %p157, %p158
    %p161 = scmp.ne.s32.totalorder %s144, %s160
    %p162 = scmp.eq.s32.totalorder %s20, 0
    %p163 = por %p161, %p162
    %s164 = ssub.s32 %s22, %s29
    %p165 = scmp.eq.s32.totalorder %s164, 0
    %s167 = sadd.s32 %s166, 1
    %s168 = scalar_select %p165, %s166, %s167
    %p171 = pneg %p165
    %p172 = scmp.eq.s32.totalorder %s14, 7
    %p173 = por %p171, %p172
    %p174 = scmp.ne.s32.totalorder %s166, %s169
    %p175 = scmp.eq.s32.totalorder %s14, 0
    %p176 = por %p174, %p175
    %p177 = scmp.ne.s32.totalorder %s166, %s169
    %p178 = scmp.eq.s32.totalorder %s19, 7
    %p179 = por %p177, %p178
    %p180 = scmp.ne.s32.totalorder %s169, %s170
    %p181 = scmp.eq.s32.totalorder %s19, 0
    %p182 = por %p180, %p181
    %p183 = scmp.ne.s32.totalorder %s169, %s170
    %p184 = scmp.eq.s32.totalorder %s20, 7
    %p185 = por %p183, %p184
    %p187 = scmp.ne.s32.totalorder %s170, %s186
    %p188 = scmp.eq.s32.totalorder %s20, 0
    %p189 = por %p187, %p188
    %s190 = ssub.s32 %s22, %s29
    %p191 = scmp.eq.s32.totalorder %s190, 0
    %s193 = sadd.s32 %s192, 1
    %s194 = scalar_select %p191, %s192, %s193
    %p197 = pneg %p191
    %p198 = scmp.eq.s32.totalorder %s14, 7
    %p199 = por %p197, %p198
    %p200 = scmp.ne.s32.totalorder %s192, %s195
    %p201 = scmp.eq.s32.totalorder %s14, 0
    %p202 = por %p200, %p201
    %p203 = scmp.ne.s32.totalorder %s192, %s195
    %p204 = scmp.eq.s32.totalorder %s19, 7
    %p205 = por %p203, %p204
    %p206 = scmp.ne.s32.totalorder %s195, %s196
    %p207 = scmp.eq.s32.totalorder %s19, 0
    %p208 = por %p206, %p207
    %p209 = scmp.ne.s32.totalorder %s195, %s196
    %p210 = scmp.eq.s32.totalorder %s20, 7
    %p211 = por %p209, %p210
    %p213 = scmp.ne.s32.totalorder %s196, %s212
    %p214 = scmp.eq.s32.totalorder %s20, 0
    %p215 = por %p213, %p214
    %s216 = ssub.s32 %s22, %s29
    %p217 = scmp.eq.s32.totalorder %s216, 0
    %s219 = sadd.s32 %s218, 1
    %s220 = scalar_select %p217, %s218, %s219
    %p223 = pneg %p217
    %p224 = scmp.eq.s32.totalorder %s14, 7
    %p225 = por %p223, %p224
    %p226 = scmp.ne.s32.totalorder %s218, %s221
    %p227 = scmp.eq.s32.totalorder %s14, 0
    %p228 = por %p226, %p227
    %p229 = scmp.ne.s32.totalorder %s218, %s221
    %p230 = scmp.eq.s32.totalorder %s19, 7
    %p231 = por %p229, %p230
    %p232 = scmp.ne.s32.totalorder %s221, %s222
    %p233 = scmp.eq.s32.totalorder %s19, 0
    %p234 = por %p232, %p233
    %p235 = scmp.ne.s32.totalorder %s221, %s222
    %p236 = scmp.eq.s32.totalorder %s20, 7
    %p237 = por %p235, %p236
    %p239 = scmp.ne.s32.totalorder %s222, %s238
    %p240 = scmp.eq.s32.totalorder %s20, 0
    %p241 = por %p239, %p240
    %s242 = ssub.s32 %s21, %s33
    %s243 = ssub.s32 %s22, %s29
    %s244 = sor.u32 %s242, %s243
    %p245 = scmp.eq.s32.totalorder %s244, 0
    %s247 = sadd.s32 %s246, 1
    %s248 = scalar_select %p245, %s246, %s247
    %p251 = pneg %p245
    %p252 = scmp.eq.s32.totalorder %s14, 7
    %p253 = por %p251, %p252
    %p254 = scmp.ne.s32.totalorder %s246, %s249
    %p255 = scmp.eq.s32.totalorder %s14, 0
    %p256 = por %p254, %p255
    %p257 = scmp.ne.s32.totalorder %s246, %s249
    %p258 = scmp.eq.s32.totalorder %s19, 7
    %p259 = por %p257, %p258
    %p260 = scmp.ne.s32.totalorder %s249, %s250
    %p261 = scmp.eq.s32.totalorder %s19, 0
    %p262 = por %p260, %p261
    %p263 = scmp.ne.s32.totalorder %s249, %s250
    %p264 = scmp.eq.s32.totalorder %s20, 7
    %p265 = por %p263, %p264
    %p267 = scmp.ne.s32.totalorder %s250, %s266
    %p268 = scmp.eq.s32.totalorder %s20, 0
    %p269 = por %p267, %p268
    %p270 = scmp.le.s32.totalorder 1, %s14
    %p271 = scmp.lt.s32.totalorder %s14, 9
    %p272 = pnand %p270, %p271
    %p273 = pneg %p272
    // Predicated region
    $region9: #{transformer_encoder_layer.2} parent=5 // pred_check
      _
    $region10: #{transformer_encoder_layer.2} parent=5 // pred_check_branch
      %275 = sbr.rel (%p272) target = $region12
    $region11: #{transformer_encoder_layer.2} parent=5 // pred_region
      %s276 = ssub.s32 %s14, 1
    $region12: #{transformer_encoder_layer.2} parent=5 // pred_fallthru
      _
    %p277 = scmp.lt.s32.totalorder %s14, 8
    // Predicated region
    $region13: #{transformer_encoder_layer.2} parent=5 // pred_check
      %p278 = pneg %p277
    $region14: #{transformer_encoder_layer.2} parent=5 // pred_check_branch
      %280 = sbr.rel (%p278) target = $region16
    $region15: #{transformer_encoder_layer.2} parent=5 // pred_region
      // Predicated region
      $region17: #{transformer_encoder_layer.2} parent=15 // pred_check
        %p281 = pneg %p46
      $region18: #{transformer_encoder_layer.2} parent=15 // pred_check_branch
        %283 = sbr.rel (%p281) target = $region20
      $region19: #{transformer_encoder_layer.2} parent=15 // pred_region
        %p284 = scmp.lt.s32.totalorder %s21, 1
        %s285 = scalar_select %p284, %s21, 1
        %s286 = smul.addr %s285, 8
        %s287 = scalar_lea.vmem %s0, %s286
      $region20: #{transformer_encoder_layer.2} parent=15 // pred_fallthru
        _
      // Predicated region
      $region21: #{transformer_encoder_layer.2} parent=15 // pred_check
        %p288 = pneg %p72
      $region22: #{transformer_encoder_layer.2} parent=15 // pred_check_branch
        %290 = sbr.rel (%p288) target = $region24
      $region23: #{transformer_encoder_layer.2} parent=15 // pred_region
        %p291 = scmp.lt.s32.totalorder %s21, 1
        %s292 = scalar_select %p291, %s21, 1
        %s293 = smul.addr %s292, 8
        %s294 = scalar_lea.vmem %s1, %s293
      $region24: #{transformer_encoder_layer.2} parent=15 // pred_fallthru
        _
      // Predicated region
      $region25: #{transformer_encoder_layer.2} parent=15 // pred_check
        %p295 = pneg %p98
      $region26: #{transformer_encoder_layer.2} parent=15 // pred_check_branch
        %297 = sbr.rel (%p295) target = $region28
      $region27: #{transformer_encoder_layer.2} parent=15 // pred_region
        %p298 = scmp.lt.s32.totalorder %s22, 3
        %s299 = scalar_select %p298, %s22, 3
        %s300 = smul.addr %s299, 4
        %s301 = smul.addr %s300, 8
        %s302 = scalar_lea.vmem %s2, %s301
      $region28: #{transformer_encoder_layer.2} parent=15 // pred_fallthru
        _
      // Predicated region
      $region29: #{transformer_encoder_layer.2} parent=15 // pred_check
        %p303 = pneg %p124
      $region30: #{transformer_encoder_layer.2} parent=15 // pred_check_branch
        %305 = sbr.rel (%p303) target = $region32
      $region31: #{transformer_encoder_layer.2} parent=15 // pred_region
        %p306 = scmp.lt.s32.totalorder %s22, 3
        %s307 = scalar_select %p306, %s22, 3
        %s308 = scalar_lea.vmem %s3, %s307
      $region32: #{transformer_encoder_layer.2} parent=15 // pred_fallthru
        _
      // Predicated region
      $region33: #{transformer_encoder_layer.2} parent=15 // pred_check
        %p309 = pneg %p150
      $region34: #{transformer_encoder_layer.2} parent=15 // pred_check_branch
        %311 = sbr.rel (%p309) target = $region36
      $region35: #{transformer_encoder_layer.2} parent=15 // pred_region
        %p312 = scmp.lt.s32.totalorder %s22, 3
        %s313 = scalar_select %p312, %s22, 3
        %s314 = smul.addr %s313, 4
        %s315 = smul.addr %s314, 8
        %s316 = scalar_lea.vmem %s4, %s315
      $region36: #{transformer_encoder_layer.2} parent=15 // pred_fallthru
        _
      // Predicated region
      $region37: #{transformer_encoder_layer.2} parent=15 // pred_check
        %p317 = pneg %p176
      $region38: #{transformer_encoder_layer.2} parent=15 // pred_check_branch
        %319 = sbr.rel (%p317) target = $region40
      $region39: #{transformer_encoder_layer.2} parent=15 // pred_region
        %p320 = scmp.lt.s32.totalorder %s22, 3
        %s321 = scalar_select %p320, %s22, 3
        %s322 = scalar_lea.vmem %s5, %s321
      $region40: #{transformer_encoder_layer.2} parent=15 // pred_fallthru
        _
      // Predicated region
      $region41: #{transformer_encoder_layer.2} parent=15 // pred_check
        %p323 = pneg %p202
      $region42: #{transformer_encoder_layer.2} parent=15 // pred_check_branch
        %325 = sbr.rel (%p323) target = $region44
      $region43: #{transformer_encoder_layer.2} parent=15 // pred_region
        %p326 = scmp.lt.s32.totalorder %s22, 3
        %s327 = scalar_select %p326, %s22, 3
        %s328 = smul.addr %s327, 4
        %s329 = smul.addr %s328, 8
        %s330 = scalar_lea.vmem %s6, %s329
      $region44: #{transformer_encoder_layer.2} parent=15 // pred_fallthru
        _
      // Predicated region
      $region45: #{transformer_encoder_layer.2} parent=15 // pred_check
        %p331 = pneg %p228
      $region46: #{transformer_encoder_layer.2} parent=15 // pred_check_branch
        %333 = sbr.rel (%p331) target = $region48
      $region47: #{transformer_encoder_layer.2} parent=15 // pred_region
        %p334 = scmp.lt.s32.totalorder %s22, 3
        %s335 = scalar_select %p334, %s22, 3
        %s336 = scalar_lea.vmem %s7, %s335
      $region48: #{transformer_encoder_layer.2} parent=15 // pred_fallthru
        _
    $region16: #{transformer_encoder_layer.2} parent=5 // pred_fallthru
      _
    %p337 = scmp.le.s32.totalorder 1, %s14
    %p338 = scmp.lt.s32.totalorder %s14, 9
    %p339 = pnand %p337, %p338
    %p340 = pneg %p339
    // Predicated region
    $region49: #{transformer_encoder_layer.2} parent=5 // pred_check
      _
    $region50: #{transformer_encoder_layer.2} parent=5 // pred_check_branch
      %342 = sbr.rel (%p339) target = $region52
    $region51: #{transformer_encoder_layer.2} parent=5 // pred_region
      %s343 = ssub.s32 %s14, 1
      %p344 = scmp.lt.s32.totalorder %s23, 1
      %s345 = scalar_select %p344, %s23, 1
      %s346 = smul.addr %s345, 8
      %s347 = scalar_lea.vmem %s0, %s346
      %p348 = pneg %p52
      %p349 = pneg %p49
      %p350 = scmp.lt.s32.totalorder %s23, 1
      %s351 = scalar_select %p350, %s23, 1
      %s352 = smul.addr %s351, 8
      %s353 = scalar_lea.vmem %s1, %s352
      %p354 = pneg %p78
      %p355 = pneg %p75
      %p356 = scmp.lt.s32.totalorder %s24, 3
      %s357 = scalar_select %p356, %s24, 3
      %s358 = smul.addr %s357, 4
      %s359 = smul.addr %s358, 8
      %s360 = scalar_lea.vmem %s2, %s359
      %p361 = pneg %p104
      %p362 = pneg %p101
      %p363 = scmp.lt.s32.totalorder %s24, 3
      %s364 = scalar_select %p363, %s24, 3
      %s365 = scalar_lea.vmem %s3, %s364
      %p366 = pneg %p130
      %p367 = pneg %p127
      %p368 = scmp.lt.s32.totalorder %s24, 3
      %s369 = scalar_select %p368, %s24, 3
      %s370 = smul.addr %s369, 4
      %s371 = smul.addr %s370, 8
      %s372 = scalar_lea.vmem %s4, %s371
      %p373 = pneg %p156
      %p374 = pneg %p153
      %p375 = scmp.lt.s32.totalorder %s24, 3
      %s376 = scalar_select %p375, %s24, 3
      %s377 = scalar_lea.vmem %s5, %s376
      %p378 = pneg %p182
      %p379 = pneg %p179
      %p380 = scmp.lt.s32.totalorder %s24, 3
      %s381 = scalar_select %p380, %s24, 3
      %s382 = smul.addr %s381, 4
      %s383 = smul.addr %s382, 8
      %s384 = scalar_lea.vmem %s6, %s383
      %p385 = pneg %p208
      %p386 = pneg %p205
      %p387 = scmp.lt.s32.totalorder %s24, 3
      %s388 = scalar_select %p387, %s24, 3
      %s389 = scalar_lea.vmem %s7, %s388
      %p390 = pneg %p234
      %p391 = pneg %p231
      %p392 = pneg %p262
      %p393 = pneg %p259
      %p394 = scmp.lt.s32.totalorder %s23, 1
      %s395 = scalar_select %p394, %s23, 1
      %p396 = scmp.lt.s32.totalorder %s24, 3
      %s397 = scalar_select %p396, %s24, 3
      %s398 = smul.addr %s395, 4
      %s399 = sadd.s32 %s397, %s398
      %s400 = smul.addr %s399, 8
      %s401 = scalar_lea.vmem %s8, %s400
      %p402 = scmp.lt.s32.totalorder %s23, 1
      %s403 = scalar_select %p402, %s23, 1
      %s404 = smul.addr %s403, 8
      %s405 = scalar_lea.vmem %s0, %s404
      %p406 = scmp.lt.s32.totalorder %s23, 1
      %s407 = scalar_select %p406, %s23, 1
      %s408 = smul.addr %s407, 8
      %s409 = scalar_lea.vmem %s1, %s408
      %p410 = scmp.lt.s32.totalorder %s24, 3
      %s411 = scalar_select %p410, %s24, 3
      %s412 = smul.addr %s411, 4
      %s413 = smul.addr %s412, 8
      %s414 = scalar_lea.vmem %s2, %s413
      %p415 = scmp.lt.s32.totalorder %s24, 3
      %s416 = scalar_select %p415, %s24, 3
      %s417 = scalar_lea.vmem %s3, %s416
      %p418 = scmp.lt.s32.totalorder %s24, 3
      %s419 = scalar_select %p418, %s24, 3
      %s420 = smul.addr %s419, 4
      %s421 = smul.addr %s420, 8
      %s422 = scalar_lea.vmem %s4, %s421
      %p423 = scmp.lt.s32.totalorder %s24, 3
      %s424 = scalar_select %p423, %s24, 3
      %s425 = scalar_lea.vmem %s5, %s424
      %p426 = scmp.lt.s32.totalorder %s24, 3
      %s427 = scalar_select %p426, %s24, 3
      %s428 = smul.addr %s427, 4
      %s429 = smul.addr %s428, 8
      %s430 = scalar_lea.vmem %s6, %s429
      %p431 = scmp.lt.s32.totalorder %s24, 3
      %s432 = scalar_select %p431, %s24, 3
      %s433 = scalar_lea.vmem %s7, %s432
      %p434 = scmp.lt.s32.totalorder %s23, 1
      %s435 = scalar_select %p434, %s23, 1
      %p436 = scmp.lt.s32.totalorder %s24, 3
      %s437 = scalar_select %p436, %s24, 3
      %s438 = smul.addr %s435, 4
      %s439 = sadd.s32 %s437, %s438
      %s440 = smul.addr %s439, 8
      %s441 = scalar_lea.vmem %s8, %s440
      %v442 = vld [vmem:[%s405] sm:$0xff]
      %v443 = vld [vmem:[%s409] sm:$0xff]
      %v444 = vadd.f32 %v442, %v443
      %v445 = vld [vmem:[%s414] sm:$0xff]
      %v446 = vld [vmem:[%s414 + $0x8] sm:$0xff]
      %v447 = vld [vmem:[%s414 + $0x10] sm:$0xff]
      %v448 = vld [vmem:[%s414 + $0x18] sm:$0xff]
      %v449 = vld [vmem:[%s417] sm:$0x1]
      %v451 = vlaneseq
      %v452 = vshrl.u32 %v451, 7
      %v453 = vsub.s32 0, %v452
      %v454 = vrot.slane %v449, %v453
      %vm456 = vcmask 261120
      %v458 = vsel %vm456, %v444, 0
      %460 = vmatprep.subr.mxu0 0.0
      %461 = vmatpush1.msra.mxu0 0.0
      %462 = vmatprep.subr.mxu0 0.0
      %463 = vmatpush1.msra.mxu0 0.0
      %464 = vmatprep.subr.mxu0 0.0
      %465 = vmatpush1.msra.mxu0 0.0
      %466 = vmatprep.subr.mxu0 0.0
      %467 = vmatpush1.msra.mxu0 0.0
      %468 = vmatprep.subr.mxu0 0.0
      %469 = vmatpush1.msra.mxu0 0.0
      %470 = vmatprep.subr.mxu0 0.0
      %471 = vmatpush1.msra.mxu0 0.0
      %472 = vmatprep.subr.mxu0 0.0
      %473 = vmatpush1.msra.mxu0 0.0
      %474 = vmatprep.subr.mxu0 0.0
      %475 = vmatpush1.msra.mxu0 0.0
      %476 = vmatprep.subr.mxu0 0.0
      %477 = vmatpush1.msra.mxu0 0.0
      %478 = vmatprep.subr.mxu0 0.0
      %479 = vmatpush1.msra.mxu0 0.0
      %480 = vmatprep.subr.mxu0 0.0
      %481 = vmatpush1.msra.mxu0 0.0
      %482 = vmatprep.subr.mxu0 0.0
      %483 = vmatpush1.msra.mxu0 0.0
      %484 = vmatprep.subr.mxu0 0.0
      %485 = vmatpush1.msra.mxu0 %v448
      %486 = vmatprep.subr.mxu0 0.0
      %487 = vmatpush1.msra.mxu0 %v447
      %488 = vmatprep.subr.mxu0 0.0
      %489 = vmatpush1.msra.mxu0 %v446
      %490 = vmatprep.subr.mxu0 0.0
      %491 = vmatpush1.msra.mxu0 %v445
      %492 = vmatprep.subr.mxu0 0.0
      %493 = vmatpush2.msra.mxu0 0.0
      %494 = vmatprep.subr.mxu0 0.0
      %495 = vmatpush2.msra.mxu0 0.0
      %496 = vmatprep.subr.mxu0 0.0
      %497 = vmatpush2.msra.mxu0 0.0
      %498 = vmatprep.subr.mxu0 0.0
      %499 = vmatpush2.msra.mxu0 0.0
      %500 = vmatprep.subr.mxu0 0.0
      %501 = vmatpush2.msra.mxu0 0.0
      %502 = vmatprep.subr.mxu0 0.0
      %503 = vmatpush2.msra.mxu0 0.0
      %504 = vmatprep.subr.mxu0 0.0
      %505 = vmatpush2.msra.mxu0 0.0
      %506 = vmatprep.subr.mxu0 0.0
      %507 = vmatpush2.msra.mxu0 0.0
      %508 = vmatprep.subr.mxu0 0.0
      %509 = vmatpush2.msra.mxu0 0.0
      %510 = vmatprep.subr.mxu0 0.0
      %511 = vmatpush2.msra.mxu0 0.0
      %512 = vmatprep.subr.mxu0 0.0
      %513 = vmatpush2.msra.mxu0 0.0
      %514 = vmatprep.subr.mxu0 0.0
      %515 = vmatpush2.msra.mxu0 0.0
      %516 = vmatprep.subr.mxu0 0.0
      %517 = vmatpush2.msra.mxu0 0.0
      %518 = vmatprep.subr.mxu0 0.0
      %519 = vmatpush2.msra.mxu0 0.0
      %520 = vmatprep.subr.mxu0 0.0
      %521 = vmatpush2.msra.mxu0 0.0
      %522 = vmatprep.subr.mxu0 0.0
      %523 = vmatpush2.msra.mxu0 0.0
      %524 = vmatprep.mubr.f32.mxu0 0.0
      %525 = vmatmul.mubr.f32.gmra.mxu0 %v458
      %v526 = vpop.f32.mrf.mxu0
      %v527 = vadd.f32 %v454, %v526
      %v528 = vpop.f32.mrf.mxu0
      %529 = vdwg.mxu0
      %v530 = vld [vmem:[%s422] sm:$0xff]
      %v531 = vld [vmem:[%s422 + $0x8] sm:$0xff]
      %v532 = vld [vmem:[%s422 + $0x10] sm:$0xff]
      %v533 = vld [vmem:[%s422 + $0x18] sm:$0xff]
      %v534 = vld [vmem:[%s425] sm:$0x1]
      %v536 = vlaneseq
      %v537 = vshrl.u32 %v536, 7
      %v538 = vsub.s32 0, %v537
      %v539 = vrot.slane %v534, %v538
      %541 = vmatprep.subr.mxu0 0.0
      %542 = vmatpush1.msra.mxu0 0.0
      %543 = vmatprep.subr.mxu0 0.0
      %544 = vmatpush1.msra.mxu0 0.0
      %545 = vmatprep.subr.mxu0 0.0
      %546 = vmatpush1.msra.mxu0 0.0
      %547 = vmatprep.subr.mxu0 0.0
      %548 = vmatpush1.msra.mxu0 0.0
      %549 = vmatprep.subr.mxu0 0.0
      %550 = vmatpush1.msra.mxu0 0.0
      %551 = vmatprep.subr.mxu0 0.0
      %552 = vmatpush1.msra.mxu0 0.0
      %553 = vmatprep.subr.mxu0 0.0
      %554 = vmatpush1.msra.mxu0 0.0
      %555 = vmatprep.subr.mxu0 0.0
      %556 = vmatpush1.msra.mxu0 0.0
      %557 = vmatprep.subr.mxu0 0.0
      %558 = vmatpush1.msra.mxu0 0.0
      %559 = vmatprep.subr.mxu0 0.0
      %560 = vmatpush1.msra.mxu0 0.0
      %561 = vmatprep.subr.mxu0 0.0
      %562 = vmatpush1.msra.mxu0 0.0
      %563 = vmatprep.subr.mxu0 0.0
      %564 = vmatpush1.msra.mxu0 0.0
      %565 = vmatprep.subr.mxu0 0.0
      %566 = vmatpush1.msra.mxu0 %v533
      %567 = vmatprep.subr.mxu0 0.0
      %568 = vmatpush1.msra.mxu0 %v532
      %569 = vmatprep.subr.mxu0 0.0
      %570 = vmatpush1.msra.mxu0 %v531
      %571 = vmatprep.subr.mxu0 0.0
      %572 = vmatpush1.msra.mxu0 %v530
      %573 = vmatprep.subr.mxu0 0.0
      %574 = vmatpush2.msra.mxu0 0.0
      %575 = vmatprep.subr.mxu0 0.0
      %576 = vmatpush2.msra.mxu0 0.0
      %577 = vmatprep.subr.mxu0 0.0
      %578 = vmatpush2.msra.mxu0 0.0
      %579 = vmatprep.subr.mxu0 0.0
      %580 = vmatpush2.msra.mxu0 0.0
      %581 = vmatprep.subr.mxu0 0.0
      %582 = vmatpush2.msra.mxu0 0.0
      %583 = vmatprep.subr.mxu0 0.0
      %584 = vmatpush2.msra.mxu0 0.0
      %585 = vmatprep.subr.mxu0 0.0
      %586 = vmatpush2.msra.mxu0 0.0
      %587 = vmatprep.subr.mxu0 0.0
      %588 = vmatpush2.msra.mxu0 0.0
      %589 = vmatprep.subr.mxu0 0.0
      %590 = vmatpush2.msra.mxu0 0.0
      %591 = vmatprep.subr.mxu0 0.0
      %592 = vmatpush2.msra.mxu0 0.0
      %593 = vmatprep.subr.mxu0 0.0
      %594 = vmatpush2.msra.mxu0 0.0
      %595 = vmatprep.subr.mxu0 0.0
      %596 = vmatpush2.msra.mxu0 0.0
      %597 = vmatprep.subr.mxu0 0.0
      %598 = vmatpush2.msra.mxu0 0.0
      %599 = vmatprep.subr.mxu0 0.0
      %600 = vmatpush2.msra.mxu0 0.0
      %601 = vmatprep.subr.mxu0 0.0
      %602 = vmatpush2.msra.mxu0 0.0
      %603 = vmatprep.subr.mxu0 0.0
      %604 = vmatpush2.msra.mxu0 0.0
      %605 = vmatprep.mubr.f32.mxu0 0.0
      %606 = vmatmul.mubr.f32.gmra.mxu0 %v458
      %v607 = vpop.f32.mrf.mxu0
      %v608 = vadd.f32 %v539, %v607
      %v609 = vpop.f32.mrf.mxu0
      %610 = vdwg.mxu0
      %v611 = vld [vmem:[%s430] sm:$0xff]
      %v612 = vld [vmem:[%s430 + $0x8] sm:$0xff]
      %v613 = vld [vmem:[%s430 + $0x10] sm:$0xff]
      %v614 = vld [vmem:[%s430 + $0x18] sm:$0xff]
      %v615 = vld [vmem:[%s433] sm:$0x1]
      %v617 = vlaneseq
      %v618 = vshrl.u32 %v617, 7
      %v619 = vsub.s32 0, %v618
      %v620 = vrot.slane %v615, %v619
      %v623 = vsel %vm456, %v442, 0
      %625 = vmatprep.subr.mxu0 0.0
      %626 = vmatpush1.msra.mxu0 0.0
      %627 = vmatprep.subr.mxu0 0.0
      %628 = vmatpush1.msra.mxu0 0.0
      %629 = vmatprep.subr.mxu0 0.0
      %630 = vmatpush1.msra.mxu0 0.0
      %631 = vmatprep.subr.mxu0 0.0
      %632 = vmatpush1.msra.mxu0 0.0
      %633 = vmatprep.subr.mxu0 0.0
      %634 = vmatpush1.msra.mxu0 0.0
      %635 = vmatprep.subr.mxu0 0.0
      %636 = vmatpush1.msra.mxu0 0.0
      %637 = vmatprep.subr.mxu0 0.0
      %638 = vmatpush1.msra.mxu0 0.0
      %639 = vmatprep.subr.mxu0 0.0
      %640 = vmatpush1.msra.mxu0 0.0
      %641 = vmatprep.subr.mxu0 0.0
      %642 = vmatpush1.msra.mxu0 0.0
      %643 = vmatprep.subr.mxu0 0.0
      %644 = vmatpush1.msra.mxu0 0.0
      %645 = vmatprep.subr.mxu0 0.0
      %646 = vmatpush1.msra.mxu0 0.0
      %647 = vmatprep.subr.mxu0 0.0
      %648 = vmatpush1.msra.mxu0 0.0
      %649 = vmatprep.subr.mxu0 0.0
      %650 = vmatpush1.msra.mxu0 %v614
      %651 = vmatprep.subr.mxu0 0.0
      %652 = vmatpush1.msra.mxu0 %v613
      %653 = vmatprep.subr.mxu0 0.0
      %654 = vmatpush1.msra.mxu0 %v612
      %655 = vmatprep.subr.mxu0 0.0
      %656 = vmatpush1.msra.mxu0 %v611
      %657 = vmatprep.subr.mxu0 0.0
      %658 = vmatpush2.msra.mxu0 0.0
      %659 = vmatprep.subr.mxu0 0.0
      %660 = vmatpush2.msra.mxu0 0.0
      %661 = vmatprep.subr.mxu0 0.0
      %662 = vmatpush2.msra.mxu0 0.0
      %663 = vmatprep.subr.mxu0 0.0
      %664 = vmatpush2.msra.mxu0 0.0
      %665 = vmatprep.subr.mxu0 0.0
      %666 = vmatpush2.msra.mxu0 0.0
      %667 = vmatprep.subr.mxu0 0.0
      %668 = vmatpush2.msra.mxu0 0.0
      %669 = vmatprep.subr.mxu0 0.0
      %670 = vmatpush2.msra.mxu0 0.0
      %671 = vmatprep.subr.mxu0 0.0
      %672 = vmatpush2.msra.mxu0 0.0
      %673 = vmatprep.subr.mxu0 0.0
      %674 = vmatpush2.msra.mxu0 0.0
      %675 = vmatprep.subr.mxu0 0.0
      %676 = vmatpush2.msra.mxu0 0.0
      %677 = vmatprep.subr.mxu0 0.0
      %678 = vmatpush2.msra.mxu0 0.0
      %679 = vmatprep.subr.mxu0 0.0
      %680 = vmatpush2.msra.mxu0 0.0
      %681 = vmatprep.subr.mxu0 0.0
      %682 = vmatpush2.msra.mxu0 0.0
      %683 = vmatprep.subr.mxu0 0.0
      %684 = vmatpush2.msra.mxu0 0.0
      %685 = vmatprep.subr.mxu0 0.0
      %686 = vmatpush2.msra.mxu0 0.0
      %687 = vmatprep.subr.mxu0 0.0
      %688 = vmatpush2.msra.mxu0 0.0
      %689 = vmatprep.mubr.f32.mxu0 0.0
      %690 = vmatmul.mubr.f32.gmra.mxu0 %v623
      %v691 = vpop.f32.mrf.mxu0
      %v692 = vadd.f32 %v620, %v691
      %v693 = vpop.f32.mrf.mxu0
      %694 = vdwg.mxu0
      %vm695 = vcmask 64512
      %v697 = vsel %vm695, %v527, 0
      %v700 = vsel %vm695, %v608, 0
      %702 = vmatprep.subr.mxu0 0.0
      %703 = vmatpush1.xpose.msra.mxu0 0.0
      %704 = vmatprep.subr.mxu0 0.0
      %705 = vmatpush1.xpose.msra.mxu0 0.0
      %706 = vmatprep.subr.mxu0 0.0
      %707 = vmatpush1.xpose.msra.mxu0 0.0
      %708 = vmatprep.subr.mxu0 0.0
      %709 = vmatpush1.xpose.msra.mxu0 0.0
      %710 = vmatprep.subr.mxu0 0.0
      %711 = vmatpush1.xpose.msra.mxu0 0.0
      %712 = vmatprep.subr.mxu0 0.0
      %713 = vmatpush1.xpose.msra.mxu0 0.0
      %714 = vmatprep.subr.mxu0 0.0
      %715 = vmatpush1.xpose.msra.mxu0 0.0
      %716 = vmatprep.subr.mxu0 0.0
      %717 = vmatpush1.xpose.msra.mxu0 0.0
      %718 = vmatprep.subr.mxu0 0.0
      %719 = vmatpush1.xpose.msra.mxu0 0.0
      %720 = vmatprep.subr.mxu0 0.0
      %721 = vmatpush1.xpose.msra.mxu0 0.0
      %722 = vmatprep.subr.mxu0 0.0
      %723 = vmatpush1.xpose.msra.mxu0 0.0
      %724 = vmatprep.subr.mxu0 0.0
      %725 = vmatpush1.xpose.msra.mxu0 0.0
      %726 = vmatprep.subr.mxu0 0.0
      %727 = vmatpush1.xpose.msra.mxu0 0.0
      %728 = vmatprep.subr.mxu0 0.0
      %729 = vmatpush1.xpose.msra.mxu0 0.0
      %730 = vmatprep.subr.mxu0 0.0
      %731 = vmatpush1.xpose.msra.mxu0 0.0
      %732 = vmatprep.subr.mxu0 0.0
      %733 = vmatpush1.xpose.msra.mxu0 %v700
      %734 = vmatprep.subr.mxu0 0.0
      %735 = vmatpush2.xpose.msra.mxu0 0.0
      %736 = vmatprep.subr.mxu0 0.0
      %737 = vmatpush2.xpose.msra.mxu0 0.0
      %738 = vmatprep.subr.mxu0 0.0
      %739 = vmatpush2.xpose.msra.mxu0 0.0
      %740 = vmatprep.subr.mxu0 0.0
      %741 = vmatpush2.xpose.msra.mxu0 0.0
      %742 = vmatprep.subr.mxu0 0.0
      %743 = vmatpush2.xpose.msra.mxu0 0.0
      %744 = vmatprep.subr.mxu0 0.0
      %745 = vmatpush2.xpose.msra.mxu0 0.0
      %746 = vmatprep.subr.mxu0 0.0
      %747 = vmatpush2.xpose.msra.mxu0 0.0
      %748 = vmatprep.subr.mxu0 0.0
      %749 = vmatpush2.xpose.msra.mxu0 0.0
      %750 = vmatprep.subr.mxu0 0.0
      %751 = vmatpush2.xpose.msra.mxu0 0.0
      %752 = vmatprep.subr.mxu0 0.0
      %753 = vmatpush2.xpose.msra.mxu0 0.0
      %754 = vmatprep.subr.mxu0 0.0
      %755 = vmatpush2.xpose.msra.mxu0 0.0
      %756 = vmatprep.subr.mxu0 0.0
      %757 = vmatpush2.xpose.msra.mxu0 0.0
      %758 = vmatprep.subr.mxu0 0.0
      %759 = vmatpush2.xpose.msra.mxu0 0.0
      %760 = vmatprep.subr.mxu0 0.0
      %761 = vmatpush2.xpose.msra.mxu0 0.0
      %762 = vmatprep.subr.mxu0 0.0
      %763 = vmatpush2.xpose.msra.mxu0 0.0
      %764 = vmatprep.subr.mxu0 0.0
      %765 = vmatpush2.xpose.msra.mxu0 0.0
      %766 = vmatprep.mubr.f32.mxu0 0.0
      %767 = vmatmul.mubr.f32.gmra.mxu0 %v697
      %v768 = vpop.f32.mrf.mxu0
      %v769 = vadd.f32 0.0, %v768
      %v770 = vpop.f32.mrf.mxu0
      %771 = vdwg.mxu0
      %v772 = vsel %vm695, %v769, -inf
      %773 = vmax.xlane.f32.xlu0 %v772
      %v774 = vpop.xlane.xlu0 %773
      %v775 = vsub.f32 %v769, %v774
      %v776 = vmul.f32 %v775, 1.442695
      %v777 = vpow.pop %v776
      %v778 = vsel %vm695, %v777, 0.0
      %779 = vadd.xlane.f32.xlu0 %v778
      %v780 = vpop.xlane.xlu0 %779
      %v781 = vrcp.pop %v780
      %v782 = vmul.f32 %v777, %v781
      %v784 = vsel %vm695, %v782, 0
      %786 = vmatprep.subr.mxu0 0.0
      %787 = vmatpush1.msra.mxu0 0.0
      %788 = vmatprep.subr.mxu0 0.0
      %789 = vmatpush1.msra.mxu0 0.0
      %790 = vmatprep.subr.mxu0 0.0
      %791 = vmatpush1.msra.mxu0 0.0
      %792 = vmatprep.subr.mxu0 0.0
      %793 = vmatpush1.msra.mxu0 0.0
      %794 = vmatprep.subr.mxu0 0.0
      %795 = vmatpush1.msra.mxu0 0.0
      %796 = vmatprep.subr.mxu0 0.0
      %797 = vmatpush1.msra.mxu0 0.0
      %798 = vmatprep.subr.mxu0 0.0
      %799 = vmatpush1.msra.mxu0 0.0
      %800 = vmatprep.subr.mxu0 0.0
      %801 = vmatpush1.msra.mxu0 0.0
      %802 = vmatprep.subr.mxu0 0.0
      %803 = vmatpush1.msra.mxu0 0.0
      %804 = vmatprep.subr.mxu0 0.0
      %805 = vmatpush1.msra.mxu0 0.0
      %806 = vmatprep.subr.mxu0 0.0
      %807 = vmatpush1.msra.mxu0 0.0
      %808 = vmatprep.subr.mxu0 0.0
      %809 = vmatpush1.msra.mxu0 0.0
      %810 = vmatprep.subr.mxu0 0.0
      %811 = vmatpush1.msra.mxu0 0.0
      %812 = vmatprep.subr.mxu0 0.0
      %813 = vmatpush1.msra.mxu0 0.0
      %814 = vmatprep.subr.mxu0 0.0
      %815 = vmatpush1.msra.mxu0 0.0
      %816 = vmatprep.subr.mxu0 0.0
      %817 = vmatpush1.msra.mxu0 %v692
      %818 = vmatprep.subr.mxu0 0.0
      %819 = vmatpush2.msra.mxu0 0.0
      %820 = vmatprep.subr.mxu0 0.0
      %821 = vmatpush2.msra.mxu0 0.0
      %822 = vmatprep.subr.mxu0 0.0
      %823 = vmatpush2.msra.mxu0 0.0
      %824 = vmatprep.subr.mxu0 0.0
      %825 = vmatpush2.msra.mxu0 0.0
      %826 = vmatprep.subr.mxu0 0.0
      %827 = vmatpush2.msra.mxu0 0.0
      %828 = vmatprep.subr.mxu0 0.0
      %829 = vmatpush2.msra.mxu0 0.0
      %830 = vmatprep.subr.mxu0 0.0
      %831 = vmatpush2.msra.mxu0 0.0
      %832 = vmatprep.subr.mxu0 0.0
      %833 = vmatpush2.msra.mxu0 0.0
      %834 = vmatprep.subr.mxu0 0.0
      %835 = vmatpush2.msra.mxu0 0.0
      %836 = vmatprep.subr.mxu0 0.0
      %837 = vmatpush2.msra.mxu0 0.0
      %838 = vmatprep.subr.mxu0 0.0
      %839 = vmatpush2.msra.mxu0 0.0
      %840 = vmatprep.subr.mxu0 0.0
      %841 = vmatpush2.msra.mxu0 0.0
      %842 = vmatprep.subr.mxu0 0.0
      %843 = vmatpush2.msra.mxu0 0.0
      %844 = vmatprep.subr.mxu0 0.0
      %845 = vmatpush2.msra.mxu0 0.0
      %846 = vmatprep.subr.mxu0 0.0
      %847 = vmatpush2.msra.mxu0 0.0
      %848 = vmatprep.subr.mxu0 0.0
      %849 = vmatpush2.msra.mxu0 0.0
      %850 = vmatprep.mubr.f32.mxu0 0.0
      %851 = vmatmul.mubr.f32.gmra.mxu0 %v784
      %v852 = vpop.f32.mrf.mxu0
      %v853 = vadd.f32 0.0, %v852
      %v854 = vpop.f32.mrf.mxu0
      %855 = vdwg.mxu0
      %856 = vst.msk [vmem:[%s441] sm:$0xff] %vm695, %v853
      %p857 = scmp.lt.s32.totalorder %s23, 1
      %s858 = scalar_select %p857, %s23, 1
      %p859 = scmp.lt.s32.totalorder %s24, 3
      %s860 = scalar_select %p859, %s24, 3
      %s861 = smul.addr %s858, 4
      %s862 = sadd.s32 %s860, %s861
      %s863 = smul.addr %s862, 8
      %s864 = scalar_lea.vmem %s8, %s863
      // Predicated region
      $region53: #{transformer_encoder_layer.2} parent=51 // pred_check
        %p865 = pneg %p259
      $region54: #{transformer_encoder_layer.2} parent=51 // pred_check_branch
        %867 = sbr.rel (%p865) target = $region56
      $region55: #{transformer_encoder_layer.2} parent=51 // pred_region
        _
      $region56: #{transformer_encoder_layer.2} parent=51 // pred_fallthru
        _
    $region52: #{transformer_encoder_layer.2} parent=5 // pred_fallthru
      _
    %p868 = scmp.le.s32.totalorder 2, %s14
    // Predicated region
    $region57: #{transformer_encoder_layer.2} parent=5 // pred_check
      %p869 = pneg %p868
    $region58: #{transformer_encoder_layer.2} parent=5 // pred_check_branch
      %871 = sbr.rel (%p869) target = $region60
    $region59: #{transformer_encoder_layer.2} parent=5 // pred_region
      %s872 = ssub.s32 %s14, 2
      // Predicated region
      $region61: #{transformer_encoder_layer.2} parent=59 // pred_check
        %p873 = pneg %p265
      $region62: #{transformer_encoder_layer.2} parent=59 // pred_check_branch
        %875 = sbr.rel (%p873) target = $region64
      $region63: #{transformer_encoder_layer.2} parent=59 // pred_region
        %p876 = scmp.lt.s32.totalorder %s25, 1
        %s877 = scalar_select %p876, %s25, 1
        %p878 = scmp.lt.s32.totalorder %s26, 3
        %s879 = scalar_select %p878, %s26, 3
        %s880 = smul.addr %s877, 4
        %s881 = sadd.s32 %s879, %s880
        %s882 = smul.addr %s881, 8
        %s883 = scalar_lea.vmem %s8, %s882
      $region64: #{transformer_encoder_layer.2} parent=59 // pred_fallthru
        _
    $region60: #{transformer_encoder_layer.2} parent=5 // pred_fallthru
      _
  $region6: #{transformer_encoder_layer.2} parent=0 // loop_footer
    %s18 = sadd.s32 1, %s14
  $region7: #{transformer_encoder_layer.2} parent=0 // loop_footer_branch
    %13 = sbr.rel target = $region3
  $region8: #{transformer_encoder_layer.2} parent=0 // loop_exit
    _

</llo_original>
